<compile_context>
chip_gen: v7x
topology: tpu7x:2x2x1
jax: 0.10.0
libtpu: 0.0.40
codegen_flags: <defaults>
</compile_context>

<pallas_src>
import math

import jax
import jax.numpy as jnp
from jax.experimental import pallas as pl
from jax.experimental.pallas import tpu as pltpu


def _sigmoid(v):
    # exp + div lowers cleanly in Mosaic (exp rides the EUP); same formula is
    # used in the pure-jnp reference so kernel/reference numerics match.
    return 1.0 / (1.0 + jnp.exp(-v))


# ---------------------------------------------------------------------------
# Fused kernel: one batch row-tile per grid step.
# ---------------------------------------------------------------------------
def _class_fc_kernel(x_ref, wc_ref, bconv_ref, w1_ref, b1_ref, w2_ref, b2_ref,
                     o_ref):
    f32 = jnp.float32
    x = x_ref[...]                                  # (TB, S, D)
    w = wc_ref[...]                                 # (3, S, 1) BN-folded conv taps

    # --- Conv1d(seq_len -> 1, k=3, pad=1) along d_model ----------------------
    # Tap t: c_t[b, d] = sum_s w[t, s] * x[b, s, d]  (sublane reduce; the lane
    # broadcast of the (S, 1) weight column is free on the VPU).
    # TODO(synk): the three reduces re-stream the x tile from VMEM; a true
    # single-pass accumulation needs (TB, D)-sized loop carries that spill at
    # the large TB we now run, so the vectorized form is kept.
    c0 = jnp.sum(x * w[0], axis=1)                  # tap needing value at d-1
    c1 = jnp.sum(x * w[1], axis=1)                  # center tap
    c2 = jnp.sum(x * w[2], axis=1)                  # tap needing value at d+1

    # +/-1 shifts along d on the XLU (pltpu.roll) + lane mask for the zero pad.
    D = c1.shape[-1]
    lane = jax.lax.broadcasted_iota(jnp.int32, c1.shape, 1)
    left = jnp.where(lane == 0, 0.0, pltpu.roll(c0, 1, axis=1))        # c0[d-1]
    right = jnp.where(lane == D - 1, 0.0, pltpu.roll(c2, D - 1, axis=1))  # c2[d+1]
    conv = c1 + left + right

    # --- BatchNorm1d(1), eval mode (scale folded into wc) + SiLU -------------
    y = conv + bconv_ref[...]
    y = y * _sigmoid(y)

    # --- Linear(d_model, d_model) + SiLU --------------------------------------
    h = jnp.dot(y, w1_ref[...], preferred_element_type=f32,
                precision=jax.lax.Precision.HIGHEST) + b1_ref[...]
    h = h * _sigmoid(h)

    # --- Linear(d_model, 1) + Sigmoid ------------------------------------------
    logit = jnp.sum(h * w2_ref[...], axis=-1, keepdims=True) + b2_ref[...]
    o_ref[...] = _sigmoid(logit).astype(o_ref.dtype)       # (TB, 1)


# ---------------------------------------------------------------------------
# Generation-aware tiling helpers.
# ---------------------------------------------------------------------------
def _vmem_capacity_bytes():
    """Per-core VMEM capacity; falls back to the smallest (v7x) size."""
    try:
        return int(pltpu.get_tpu_info().vmem_capacity_bytes)
    except Exception:
        return 64 * 1024 * 1024


def _pick_batch_tile(B, S, D, itemsize, vmem_cap, weight_bytes):
    """Largest batch row-tile whose double-buffered x block (+ one f32-sized
    reduce temporary + resident weights) fits in ~60% of this generation's
    VMEM, while guaranteeing >= 2 grid steps whenever the batch can legally be
    split (the out-block row count must be a multiple of 8 unless it equals B)."""
    budget = int(vmem_cap * 0.6) - weight_bytes - (2 << 20)
    per_row = S * D * (2 * itemsize + 4) + 8 * D * 4
    rows = max(budget, per_row) // per_row
    rows = max(8, (rows // 8) * 8)
    half8 = ((((B + 1) // 2) + 7) // 8) * 8          # round8(ceil(B / 2))
    if half8 < B:
        rows = min(rows, half8)                      # >= 2 grid steps
    return B if rows >= B else rows


def class_fc_forward(x, params, *, pred_len):
    """x: (B, seq_len, d_model) -> (B, pred_len, 1). Eval-mode forward.

    x may be bf16 on bandwidth-starved parts (v5e); products promote to f32
    inside the kernel, weights stay f32."""
    B, S, D = x.shape
    f32 = jnp.float32
    eps = 1e-5

    # Fold eval-mode BatchNorm1d(1) into the bias-free conv: scale -> weights,
    # shift -> a lane-broadcast bias row added before the SiLU.
    bn_scale = params["bn_gamma"] * jax.lax.rsqrt(params["bn_var"] + eps)
    bn_shift = params["bn_beta"] - params["bn_mean"] * bn_scale

    # Conv taps kept lane-thin: wc[t, s, 0] = W_conv[s, t] * bn_scale.
    wc = (params["wc"] * bn_scale).astype(f32).T[:, :, None]     # (3, S, 1)
    bconv = jnp.broadcast_to(bn_shift.astype(f32), (1, D))

    w1 = params["w1"].astype(f32)                                # (D, D)
    b1 = params["b1"].astype(f32).reshape(1, D)
    w2 = params["w2"].astype(f32).reshape(1, D)
    b2 = params["b2"].astype(f32).reshape(1, 1)

    itemsize = x.dtype.itemsize
    cap = _vmem_capacity_bytes()
    # All weight inputs, double-buffered by Pallas (constant index maps).
    weight_bytes = 2 * 4 * (3 * S + D * D + 3 * D + 1)
    TB = _pick_batch_tile(B, S, D, itemsize, cap, weight_bytes)
    grid = (pl.cdiv(B, TB),)

    x_tile_bytes = TB * S * D * itemsize
    need = 2 * x_tile_bytes + TB * S * D * 4 + weight_bytes + (16 << 20)
    vmem_limit = int(min(int(cap * 0.9), max(need, 32 << 20)))

    prob = pl.pallas_call(
        _class_fc_kernel,
        out_shape=jax.ShapeDtypeStruct((B, 1), x.dtype),
        grid=grid,
        in_specs=[
            pl.BlockSpec((TB, S, D), lambda i: (i, 0, 0)),   # x: row-tiled, pipelined
            pl.BlockSpec((3, S, 1), lambda i: (0, 0, 0)),    # conv taps (resident)
            pl.BlockSpec((1, D), lambda i: (0, 0)),          # BN shift row
            pl.BlockSpec((D, D), lambda i: (0, 0)),          # w1 (resident)
            pl.BlockSpec((1, D), lambda i: (0, 0)),          # b1
            pl.BlockSpec((1, D), lambda i: (0, 0)),          # w2 row
            pl.BlockSpec((1, 1), lambda i: (0, 0)),          # b2
        ],
        out_specs=pl.BlockSpec((TB, 1), lambda i: (i, 0)),
        compiler_params=pltpu.CompilerParams(
            dimension_semantics=("parallel",),               # megacore / 2-TC v7x
            vmem_limit_bytes=vmem_limit,
        ),
    )(x, wc, bconv, w1, b1, w2, b2)

    # .expand(-1, pred_len, -1) outside the kernel: free XLA broadcast.
    return jnp.broadcast_to(prob[:, None, :], (B, pred_len, 1))


# ---------------------------------------------------------------------------
# Pure-jnp reference (eval-mode), parameter init, and self-check.
# ---------------------------------------------------------------------------
def class_fc_reference(x, params, *, pred_len, eps=1e-5):
    B, S, D = x.shape
    hi = jax.lax.Precision.HIGHEST
    xp = jnp.pad(x, ((0, 0), (0, 0), (1, 1)))
    conv = sum(jnp.einsum("bsd,s->bd", xp[:, :, k:k + D], params["wc"][:, k],
                          precision=hi)
               for k in range(3))
    z = (conv - params["bn_mean"]) * jax.lax.rsqrt(params["bn_var"] + eps) \
        * params["bn_gamma"] + params["bn_beta"]
    z = z * _sigmoid(z)
    h = jnp.dot(z, params["w1"], precision=hi) + params["b1"]
    h = h * _sigmoid(h)
    logit = jnp.sum(h * params["w2"], axis=-1, keepdims=True) + params["b2"]
    prob = _sigmoid(logit)                                       # (B, 1)
    return jnp.broadcast_to(prob[:, None, :], (B, pred_len, 1))


def init_class_fc_params(key, seq_len, d_model):
    """Deterministic synthetic parameters (NOT a checkpoint load)."""
    ks = jax.random.split(key, 5)
    return dict(
        wc=jax.random.normal(ks[0], (seq_len, 3), jnp.float32)
           * (1.0 / math.sqrt(3 * seq_len)),                 # Conv1d weight (in_ch=S, k=3)
        bn_gamma=jnp.ones((), jnp.float32),                  # BatchNorm1d(1) defaults
        bn_beta=jnp.zeros((), jnp.float32),
        bn_mean=jnp.zeros((), jnp.float32),
        bn_var=jnp.ones((), jnp.float32),
        w1=jax.random.normal(ks[1], (d_model, d_model), jnp.float32)
           * (1.0 / math.sqrt(d_model)),                     # Linear(d_model, d_model)
        b1=jax.random.normal(ks[2], (d_model,), jnp.float32) * 0.05,
        w2=jax.random.normal(ks[3], (d_model,), jnp.float32)
           * (1.0 / math.sqrt(d_model)),                     # Linear(d_model, 1)
        b2=jax.random.normal(ks[4], (), jnp.float32) * 0.05,
    )


if __name__ == "__main__":
    key = jax.random.PRNGKey(0)
    kx, kp = jax.random.split(key)

    # Small shapes; B=16 -> 2 grid steps, d_model=128 -> one full lane tile.
    B, seq_len, pred_len, d_model = 16, 8, 8, 128
    x = jax.random.normal(kx, (B, seq_len, d_model), jnp.float32)
    params = init_class_fc_params(kp, seq_len, d_model)

    fwd = jax.jit(class_fc_forward, static_argnames=("pred_len",))
    out = fwd(x, params, pred_len=pred_len)
    jax.block_until_ready(out)

    ref = class_fc_reference(x, params, pred_len=pred_len)
    assert out.shape == (B, pred_len, 1), out.shape
    assert bool(jnp.all(jnp.isfinite(out)))
    assert bool(jnp.allclose(out, ref, rtol=1e-4, atol=1e-5)), \
        float(jnp.max(jnp.abs(out - ref)))
    print("KERNEL_OK")
</pallas_src>

<mosaic_0001>
module attributes {stable_mosaic.version = 11 : i64} {
  func.func @_class_fc_kernel(%arg0: i32, %arg1: memref<8x8x128xf32, #tpu.memory_space<vmem>>, %arg2: memref<3x8x1xf32, #tpu.memory_space<vmem>>, %arg3: memref<1x128xf32, #tpu.memory_space<vmem>>, %arg4: memref<128x128xf32, #tpu.memory_space<vmem>>, %arg5: memref<1x128xf32, #tpu.memory_space<vmem>>, %arg6: memref<1x128xf32, #tpu.memory_space<vmem>>, %arg7: memref<1x1xf32, #tpu.memory_space<vmem>>, %arg8: memref<8x1xf32, #tpu.memory_space<vmem>>) attributes {dimension_semantics = [#tpu.dimension_semantics<parallel>], iteration_bounds = array<i64: 2>, scalar_prefetch = 0 : i64, scratch_operands = 0 : i64, tpu.core_type = #tpu.core_type<tc>, window_params = [{transform_indices = @transform_0, window_bounds = array<i64: 8, 8, 128>}, {pipeline_mode = #tpu.pipeline_mode<synchronous>, transform_indices = @transform_1, window_bounds = array<i64: 3, 8, 1>}, {pipeline_mode = #tpu.pipeline_mode<synchronous>, transform_indices = @transform_2, window_bounds = array<i64: 1, 128>}, {pipeline_mode = #tpu.pipeline_mode<synchronous>, transform_indices = @transform_3, window_bounds = array<i64: 128, 128>}, {pipeline_mode = #tpu.pipeline_mode<synchronous>, transform_indices = @transform_4, window_bounds = array<i64: 1, 128>}, {pipeline_mode = #tpu.pipeline_mode<synchronous>, transform_indices = @transform_5, window_bounds = array<i64: 1, 128>}, {pipeline_mode = #tpu.pipeline_mode<synchronous>, transform_indices = @transform_6, window_bounds = array<i64: 1, 1>}, {transform_indices = @transform_7, window_bounds = array<i64: 8, 1>}]} {
    %c0 = arith.constant 0 : index
    %c0_0 = arith.constant 0 : index
    %c0_1 = arith.constant 0 : index
    %0 = vector.load %arg1[%c0, %c0_0, %c0_1] : memref<8x8x128xf32, #tpu.memory_space<vmem>>, vector<8x8x128xf32>
    %c0_2 = arith.constant 0 : index
    %c0_3 = arith.constant 0 : index
    %c0_4 = arith.constant 0 : index
    %1 = vector.load %arg2[%c0_2, %c0_3, %c0_4] : memref<3x8x1xf32, #tpu.memory_space<vmem>>, vector<3x8x1xf32>
    %2 = vector.extract_strided_slice %1 {offsets = [0, 0, 0], sizes = [1, 8, 1], strides = [1, 1, 1]} : vector<3x8x1xf32> to vector<1x8x1xf32>
    %3 = vector.shape_cast %2 : vector<1x8x1xf32> to vector<8x1xf32>
    %4 = vector.shape_cast %3 : vector<8x1xf32> to vector<1x8x1xf32>
    %5 = vector.broadcast %4 : vector<1x8x1xf32> to vector<8x8x128xf32>
    %6 = arith.mulf %0, %5 : vector<8x8x128xf32>
    %cst = arith.constant dense<0.000000e+00> : vector<8x128xf32>
    %7 = vector.multi_reduction <add>, %6, %cst [1] : vector<8x8x128xf32> to vector<8x128xf32>
    %8 = vector.extract_strided_slice %1 {offsets = [1, 0, 0], sizes = [1, 8, 1], strides = [1, 1, 1]} : vector<3x8x1xf32> to vector<1x8x1xf32>
    %9 = vector.shape_cast %8 : vector<1x8x1xf32> to vector<8x1xf32>
    %10 = vector.shape_cast %9 : vector<8x1xf32> to vector<1x8x1xf32>
    %11 = vector.broadcast %10 : vector<1x8x1xf32> to vector<8x8x128xf32>
    %12 = arith.mulf %0, %11 : vector<8x8x128xf32>
    %cst_5 = arith.constant dense<0.000000e+00> : vector<8x128xf32>
    %13 = vector.multi_reduction <add>, %12, %cst_5 [1] : vector<8x8x128xf32> to vector<8x128xf32>
    %14 = vector.extract_strided_slice %1 {offsets = [2, 0, 0], sizes = [1, 8, 1], strides = [1, 1, 1]} : vector<3x8x1xf32> to vector<1x8x1xf32>
    %15 = vector.shape_cast %14 : vector<1x8x1xf32> to vector<8x1xf32>
    %16 = vector.shape_cast %15 : vector<8x1xf32> to vector<1x8x1xf32>
    %17 = vector.broadcast %16 : vector<1x8x1xf32> to vector<8x8x128xf32>
    %18 = arith.mulf %0, %17 : vector<8x8x128xf32>
    %cst_6 = arith.constant dense<0.000000e+00> : vector<8x128xf32>
    %19 = vector.multi_reduction <add>, %18, %cst_6 [1] : vector<8x8x128xf32> to vector<8x128xf32>
    %20 = tpu.iota {dimensions = array<i32: 1>} : vector<8x128xi32>
    %c0_i32 = arith.constant 0 : i32
    %21 = vector.broadcast %c0_i32 : i32 to vector<8x128xi32>
    %22 = arith.cmpi eq, %20, %21 : vector<8x128xi32>
    %c1_i32 = arith.constant 1 : i32
    %23 = tpu.dynamic_rotate %7 by %c1_i32 dim 1 : vector<8x128xf32>, i32 -> vector<8x128xf32>
    %cst_7 = arith.constant 0.000000e+00 : f32
    %24 = vector.broadcast %cst_7 : f32 to vector<8x128xf32>
    %25 = arith.select %22, %24, %23 : vector<8x128xi1>, vector<8x128xf32>
    %c127_i32 = arith.constant 127 : i32
    %26 = vector.broadcast %c127_i32 : i32 to vector<8x128xi32>
    %27 = arith.cmpi eq, %20, %26 : vector<8x128xi32>
    %c127_i32_8 = arith.constant 127 : i32
    %28 = tpu.dynamic_rotate %19 by %c127_i32_8 dim 1 : vector<8x128xf32>, i32 -> vector<8x128xf32>
    %cst_9 = arith.constant 0.000000e+00 : f32
    %29 = vector.broadcast %cst_9 : f32 to vector<8x128xf32>
    %30 = arith.select %27, %29, %28 : vector<8x128xi1>, vector<8x128xf32>
    %31 = arith.addf %13, %25 : vector<8x128xf32>
    %32 = arith.addf %31, %30 : vector<8x128xf32>
    %c0_10 = arith.constant 0 : index
    %c0_11 = arith.constant 0 : index
    %33 = vector.load %arg3[%c0_10, %c0_11] : memref<1x128xf32, #tpu.memory_space<vmem>>, vector<1x128xf32>
    %34 = vector.broadcast %33 : vector<1x128xf32> to vector<8x128xf32>
    %35 = arith.addf %32, %34 : vector<8x128xf32>
    %cst_12 = arith.constant 0.000000e+00 : f32
    %36 = vector.broadcast %cst_12 : f32 to vector<8x128xf32>
    %37 = arith.subf %36, %35 : vector<8x128xf32>
    %38 = math.exp %37 : vector<8x128xf32>
    %cst_13 = arith.constant 1.000000e+00 : f32
    %39 = vector.broadcast %cst_13 : f32 to vector<8x128xf32>
    %40 = arith.addf %39, %38 : vector<8x128xf32>
    %cst_14 = arith.constant 1.000000e+00 : f32
    %41 = vector.broadcast %cst_14 : f32 to vector<8x128xf32>
    %42 = arith.divf %41, %40 : vector<8x128xf32>
    %43 = arith.mulf %35, %42 : vector<8x128xf32>
    %c0_15 = arith.constant 0 : index
    %c0_16 = arith.constant 0 : index
    %44 = vector.load %arg4[%c0_15, %c0_16] : memref<128x128xf32, #tpu.memory_space<vmem>>, vector<128x128xf32>
    %cst_17 = arith.constant dense<0.000000e+00> : vector<8x128xf32>
    %45 = tpu.matmul %43, %44, %cst_17 {dimension_numbers = #tpu.dot_dimension_numbers<[1], [0], [0], [1], [0, 0, 1, 1], [], []>, precision = #tpu.contract_precision<fp32>} : vector<8x128xf32>, vector<128x128xf32>, vector<8x128xf32> -> vector<8x128xf32>
    %c0_18 = arith.constant 0 : index
    %c0_19 = arith.constant 0 : index
    %46 = vector.load %arg5[%c0_18, %c0_19] : memref<1x128xf32, #tpu.memory_space<vmem>>, vector<1x128xf32>
    %47 = vector.broadcast %46 : vector<1x128xf32> to vector<8x128xf32>
    %48 = arith.addf %45, %47 : vector<8x128xf32>
    %cst_20 = arith.constant 0.000000e+00 : f32
    %49 = vector.broadcast %cst_20 : f32 to vector<8x128xf32>
    %50 = arith.subf %49, %48 : vector<8x128xf32>
    %51 = math.exp %50 : vector<8x128xf32>
    %cst_21 = arith.constant 1.000000e+00 : f32
    %52 = vector.broadcast %cst_21 : f32 to vector<8x128xf32>
    %53 = arith.addf %52, %51 : vector<8x128xf32>
    %cst_22 = arith.constant 1.000000e+00 : f32
    %54 = vector.broadcast %cst_22 : f32 to vector<8x128xf32>
    %55 = arith.divf %54, %53 : vector<8x128xf32>
    %56 = arith.mulf %48, %55 : vector<8x128xf32>
    %c0_23 = arith.constant 0 : index
    %c0_24 = arith.constant 0 : index
    %57 = vector.load %arg6[%c0_23, %c0_24] : memref<1x128xf32, #tpu.memory_space<vmem>>, vector<1x128xf32>
    %58 = vector.broadcast %57 : vector<1x128xf32> to vector<8x128xf32>
    %59 = arith.mulf %56, %58 : vector<8x128xf32>
    %cst_25 = arith.constant dense<0.000000e+00> : vector<8xf32>
    %60 = vector.multi_reduction <add>, %59, %cst_25 [1] : vector<8x128xf32> to vector<8xf32>
    %61 = vector.shape_cast %60 : vector<8xf32> to vector<8x1xf32>
    %c0_26 = arith.constant 0 : index
    %c0_27 = arith.constant 0 : index
    %62 = vector.load %arg7[%c0_26, %c0_27] : memref<1x1xf32, #tpu.memory_space<vmem>>, vector<1x1xf32>
    %63 = vector.broadcast %62 : vector<1x1xf32> to vector<8x1xf32>
    %64 = arith.addf %61, %63 : vector<8x1xf32>
    %cst_28 = arith.constant 0.000000e+00 : f32
    %65 = vector.broadcast %cst_28 : f32 to vector<8x1xf32>
    %66 = arith.subf %65, %64 : vector<8x1xf32>
    %67 = math.exp %66 : vector<8x1xf32>
    %cst_29 = arith.constant 1.000000e+00 : f32
    %68 = vector.broadcast %cst_29 : f32 to vector<8x1xf32>
    %69 = arith.addf %68, %67 : vector<8x1xf32>
    %cst_30 = arith.constant 1.000000e+00 : f32
    %70 = vector.broadcast %cst_30 : f32 to vector<8x1xf32>
    %71 = arith.divf %70, %69 : vector<8x1xf32>
    %c0_31 = arith.constant 0 : index
    %c0_32 = arith.constant 0 : index
    %72 = vector.load %arg8[%c0_31, %c0_32] : memref<8x1xf32, #tpu.memory_space<vmem>>, vector<8x1xf32>
    tpu.vector_store %arg8[%c0_31, %c0_32], %71 {strides = array<i32>} : memref<8x1xf32, #tpu.memory_space<vmem>>, vector<8x1xf32>,
    return
  }
  func.func @transform_0(%arg0: i32) -> (i32, i32, i32) {
    %c0_i32 = arith.constant 0 : i32
    %c0_i32_0 = arith.constant 0 : i32
    %c0_i32_1 = arith.constant 0 : i32
    return %arg0, %c0_i32, %c0_i32_0 : i32, i32, i32
  }
  func.func @transform_1(%arg0: i32) -> (i32, i32, i32) {
    %c0_i32 = arith.constant 0 : i32
    %c0_i32_0 = arith.constant 0 : i32
    %c0_i32_1 = arith.constant 0 : i32
    %c0_i32_2 = arith.constant 0 : i32
    return %c0_i32, %c0_i32_0, %c0_i32_1 : i32, i32, i32
  }
  func.func @transform_2(%arg0: i32) -> (i32, i32) {
    %c0_i32 = arith.constant 0 : i32
    %c0_i32_0 = arith.constant 0 : i32
    %c0_i32_1 = arith.constant 0 : i32
    return %c0_i32, %c0_i32_0 : i32, i32
  }
  func.func @transform_3(%arg0: i32) -> (i32, i32) {
    %c0_i32 = arith.constant 0 : i32
    %c0_i32_0 = arith.constant 0 : i32
    %c0_i32_1 = arith.constant 0 : i32
    return %c0_i32, %c0_i32_0 : i32, i32
  }
  func.func @transform_4(%arg0: i32) -> (i32, i32) {
    %c0_i32 = arith.constant 0 : i32
    %c0_i32_0 = arith.constant 0 : i32
    %c0_i32_1 = arith.constant 0 : i32
    return %c0_i32, %c0_i32_0 : i32, i32
  }
  func.func @transform_5(%arg0: i32) -> (i32, i32) {
    %c0_i32 = arith.constant 0 : i32
    %c0_i32_0 = arith.constant 0 : i32
    %c0_i32_1 = arith.constant 0 : i32
    return %c0_i32, %c0_i32_0 : i32, i32
  }
  func.func @transform_6(%arg0: i32) -> (i32, i32) {
    %c0_i32 = arith.constant 0 : i32
    %c0_i32_0 = arith.constant 0 : i32
    %c0_i32_1 = arith.constant 0 : i32
    return %c0_i32, %c0_i32_0 : i32, i32
  }
  func.func @transform_7(%arg0: i32) -> (i32, i32) {
    %c0_i32 = arith.constant 0 : i32
    %c0_i32_0 = arith.constant 0 : i32
    return %arg0, %c0_i32 : i32, i32
  }
}

</mosaic_0001>

<llo_original>
// kernel: class_fc_forward.1
$region0: #{class_fc_forward.1}
  #allocation0 [shape = 'u32[]', space=smem, size = 0x4, offset = 0x4, fixed_abs, tag = 'smem constant byte address 0x4 - core index']
  #allocation1 [shape = 'u32[144,128]{1,0:T(1,128)}', space=vmem, size = 0x12000, scoped, tag = 'internal scratch']
  #allocation2 [shape = 'f32[1,1]{1,0:T(1,128)S(1)}', space=vmem, size = 0x200, scoped, tag = 'scoped memory for class_fc_forward.1']
  %s0 = inlined_call_operand.hbm [shape: f32[16,8,128], index: 0, kind: input, shape index: {}]
  %s1 = inlined_call_operand.vmem [shape: f32[3,8,1], index: 1, kind: input, shape index: {}]
  %s2 = inlined_call_operand.vmem [shape: f32[1,128], index: 2, kind: input, shape index: {}]
  %s3 = inlined_call_operand.hbm [shape: f32[128,128], index: 3, kind: input, shape index: {}]
  %s4 = inlined_call_operand.vmem [shape: f32[1,128], index: 4, kind: input, shape index: {}]
  %s5 = inlined_call_operand.vmem [shape: f32[1,128], index: 5, kind: input, shape index: {}]
  %s6 = inlined_call_operand.<no memory space> [shape: f32[1,1], index: 6, kind: input, shape index: {}]
  %s7 = inlined_call_operand.vmem [shape: f32[16,1], index: 7, kind: output, shape index: {}]
  %s8 = sld [smem:[#allocation0]]
  $region69: #{class_fc_forward.1} parent=0
    _
  %s10 = ssub.s32 1, %s8
  %s11 = scalar_select 0, %s10, %s8
  %v12 = vstv %s6
  %13 = vst [vmem:[#allocation2] sm:$0x1] %v12
  $region1: #{class_fc_forward.1} parent=0
    #allocation3 [shape = 'u8[65536]{0}', space=vmem, size = 0x10000, scoped, tag = 'input window, operand 0']
    #allocation4 [shape = 's32[2]{0}', space=sflag, size = 0x8, scoped, tag = 'scoped memory for class_fc_forward.1']
    #allocation5 [shape = 'u8[65536]{0}', space=vmem, size = 0x10000, scoped, tag = 'input window, operand 3, single buffered']
    #allocation6 [shape = 's32[1]{0}', space=sflag, size = 0x4, scoped, tag = 'scoped memory for class_fc_forward.1']
    %14 = vsyncpa [#allocation4], 0
    %s15 = scalar_lea.sflag [#allocation4], 1
    %16 = vsyncpa %s15, 0
    %17 = vsyncpa [#allocation6], 0
    loop: start=0, step=1, limit=4
    $region2: #{class_fc_forward.1} parent=1 // loop_pre_header
      _
    $region3: #{class_fc_forward.1} parent=1 // loop_header
      %s19 = sphi 0, %s23
      %p20 = scmp.ge.s32.totalorder %s19, 4
      %s29 = sphi 0, %s31
      %s32 = sphi 0, %s29
      %s33 = sphi 0, %s32
      %s49 = sphi 0, %s33
      %s53 = sphi 0, %s53
      %s55 = sphi 0, %s53
      %s56 = sphi 0, %s55
      %s70 = sphi 0, %s56
      %s74 = sphi 0, %s74
      %s76 = sphi 0, %s74
      %s77 = sphi 0, %s76
      %s91 = sphi 0, %s77
      %s95 = sphi 0, %s95
      %s97 = sphi 0, %s95
      %s98 = sphi 0, %s97
      %s112 = sphi 0, %s98
      %s116 = sphi 0, %s116
      %s118 = sphi 0, %s116
      %s119 = sphi 0, %s118
      %s133 = sphi 0, %s119
      %s137 = sphi 0, %s137
      %s139 = sphi 0, %s137
      %s140 = sphi 0, %s139
      %s154 = sphi 0, %s140
      %s158 = sphi 0, %s158
      %s160 = sphi 0, %s158
      %s161 = sphi 0, %s160
      %s175 = sphi 0, %s161
      %s181 = sphi 0, %s183
      %s184 = sphi 0, %s181
      %s185 = sphi 0, %s184
      %s201 = sphi 0, %s185
    $region4: #{class_fc_forward.1} parent=1 // loop_header_branch
      %22 = sbr.rel (%p20) target = $region8
    $region5: #{class_fc_forward.1} parent=1 // loop_body
      %s24 = ssub.s32 %s19, 1
      %s25 = ssub.s32 %s19, 2
      %s26 = sadd.s32 %s19, 1
      %s27 = ssub.s32 %s19, %s26
      %p28 = scmp.eq.s32.totalorder %s27, 0
      %s30 = sadd.s32 %s29, 1
      %s31 = scalar_select %p28, %s29, %s30
      %p34 = pneg %p28
      %p35 = scmp.eq.s32.totalorder %s19, 1
      %p36 = por %p34, %p35
      %p37 = scmp.ne.s32.totalorder %s29, %s32
      %p38 = scmp.eq.s32.totalorder %s19, 0
      %p39 = por %p37, %p38
      %p40 = scmp.ne.s32.totalorder %s29, %s32
      %p41 = scmp.eq.s32.totalorder %s24, 1
      %p42 = por %p40, %p41
      %p43 = scmp.ne.s32.totalorder %s32, %s33
      %p44 = scmp.eq.s32.totalorder %s24, 0
      %p45 = por %p43, %p44
      %p46 = scmp.ne.s32.totalorder %s32, %s33
      %p47 = scmp.eq.s32.totalorder %s25, 1
      %p48 = por %p46, %p47
      %p50 = scmp.ne.s32.totalorder %s33, %s49
      %p51 = scmp.eq.s32.totalorder %s25, 0
      %p52 = por %p50, %p51
      %s54 = sadd.s32 %s53, 1
      %p57 = scmp.eq.s32.totalorder %s19, 1
      %p58 = scmp.ne.s32.totalorder %s53, %s55
      %p59 = scmp.eq.s32.totalorder %s19, 0
      %p60 = por %p58, %p59
      %p61 = scmp.ne.s32.totalorder %s53, %s55
      %p62 = scmp.eq.s32.totalorder %s24, 1
      %p63 = por %p61, %p62
      %p64 = scmp.ne.s32.totalorder %s55, %s56
      %p65 = scmp.eq.s32.totalorder %s24, 0
      %p66 = por %p64, %p65
      %p67 = scmp.ne.s32.totalorder %s55, %s56
      %p68 = scmp.eq.s32.totalorder %s25, 1
      %p69 = por %p67, %p68
      %p71 = scmp.ne.s32.totalorder %s56, %s70
      %p72 = scmp.eq.s32.totalorder %s25, 0
      %p73 = por %p71, %p72
      %s75 = sadd.s32 %s74, 1
      %p78 = scmp.eq.s32.totalorder %s19, 1
      %p79 = scmp.ne.s32.totalorder %s74, %s76
      %p80 = scmp.eq.s32.totalorder %s19, 0
      %p81 = por %p79, %p80
      %p82 = scmp.ne.s32.totalorder %s74, %s76
      %p83 = scmp.eq.s32.totalorder %s24, 1
      %p84 = por %p82, %p83
      %p85 = scmp.ne.s32.totalorder %s76, %s77
      %p86 = scmp.eq.s32.totalorder %s24, 0
      %p87 = por %p85, %p86
      %p88 = scmp.ne.s32.totalorder %s76, %s77
      %p89 = scmp.eq.s32.totalorder %s25, 1
      %p90 = por %p88, %p89
      %p92 = scmp.ne.s32.totalorder %s77, %s91
      %p93 = scmp.eq.s32.totalorder %s25, 0
      %p94 = por %p92, %p93
      %s96 = sadd.s32 %s95, 1
      %p99 = scmp.eq.s32.totalorder %s19, 1
      %p100 = scmp.ne.s32.totalorder %s95, %s97
      %p101 = scmp.eq.s32.totalorder %s19, 0
      %p102 = por %p100, %p101
      %p103 = scmp.ne.s32.totalorder %s95, %s97
      %p104 = scmp.eq.s32.totalorder %s24, 1
      %p105 = por %p103, %p104
      %p106 = scmp.ne.s32.totalorder %s97, %s98
      %p107 = scmp.eq.s32.totalorder %s24, 0
      %p108 = por %p106, %p107
      %p109 = scmp.ne.s32.totalorder %s97, %s98
      %p110 = scmp.eq.s32.totalorder %s25, 1
      %p111 = por %p109, %p110
      %p113 = scmp.ne.s32.totalorder %s98, %s112
      %p114 = scmp.eq.s32.totalorder %s25, 0
      %p115 = por %p113, %p114
      %s117 = sadd.s32 %s116, 1
      %p120 = scmp.eq.s32.totalorder %s19, 1
      %p121 = scmp.ne.s32.totalorder %s116, %s118
      %p122 = scmp.eq.s32.totalorder %s19, 0
      %p123 = por %p121, %p122
      %p124 = scmp.ne.s32.totalorder %s116, %s118
      %p125 = scmp.eq.s32.totalorder %s24, 1
      %p126 = por %p124, %p125
      %p127 = scmp.ne.s32.totalorder %s118, %s119
      %p128 = scmp.eq.s32.totalorder %s24, 0
      %p129 = por %p127, %p128
      %p130 = scmp.ne.s32.totalorder %s118, %s119
      %p131 = scmp.eq.s32.totalorder %s25, 1
      %p132 = por %p130, %p131
      %p134 = scmp.ne.s32.totalorder %s119, %s133
      %p135 = scmp.eq.s32.totalorder %s25, 0
      %p136 = por %p134, %p135
      %s138 = sadd.s32 %s137, 1
      %p141 = scmp.eq.s32.totalorder %s19, 1
      %p142 = scmp.ne.s32.totalorder %s137, %s139
      %p143 = scmp.eq.s32.totalorder %s19, 0
      %p144 = por %p142, %p143
      %p145 = scmp.ne.s32.totalorder %s137, %s139
      %p146 = scmp.eq.s32.totalorder %s24, 1
      %p147 = por %p145, %p146
      %p148 = scmp.ne.s32.totalorder %s139, %s140
      %p149 = scmp.eq.s32.totalorder %s24, 0
      %p150 = por %p148, %p149
      %p151 = scmp.ne.s32.totalorder %s139, %s140
      %p152 = scmp.eq.s32.totalorder %s25, 1
      %p153 = por %p151, %p152
      %p155 = scmp.ne.s32.totalorder %s140, %s154
      %p156 = scmp.eq.s32.totalorder %s25, 0
      %p157 = por %p155, %p156
      %s159 = sadd.s32 %s158, 1
      %p162 = scmp.eq.s32.totalorder %s19, 1
      %p163 = scmp.ne.s32.totalorder %s158, %s160
      %p164 = scmp.eq.s32.totalorder %s19, 0
      %p165 = por %p163, %p164
      %p166 = scmp.ne.s32.totalorder %s158, %s160
      %p167 = scmp.eq.s32.totalorder %s24, 1
      %p168 = por %p166, %p167
      %p169 = scmp.ne.s32.totalorder %s160, %s161
      %p170 = scmp.eq.s32.totalorder %s24, 0
      %p171 = por %p169, %p170
      %p172 = scmp.ne.s32.totalorder %s160, %s161
      %p173 = scmp.eq.s32.totalorder %s25, 1
      %p174 = por %p172, %p173
      %p176 = scmp.ne.s32.totalorder %s161, %s175
      %p177 = scmp.eq.s32.totalorder %s25, 0
      %p178 = por %p176, %p177
      %s179 = ssub.s32 %s19, %s26
      %p180 = scmp.eq.s32.totalorder %s179, 0
      %s182 = sadd.s32 %s181, 1
      %s183 = scalar_select %p180, %s181, %s182
      %p186 = pneg %p180
      %p187 = scmp.eq.s32.totalorder %s19, 1
      %p188 = por %p186, %p187
      %p189 = scmp.ne.s32.totalorder %s181, %s184
      %p190 = scmp.eq.s32.totalorder %s19, 0
      %p191 = por %p189, %p190
      %p192 = scmp.ne.s32.totalorder %s181, %s184
      %p193 = scmp.eq.s32.totalorder %s24, 1
      %p194 = por %p192, %p193
      %p195 = scmp.ne.s32.totalorder %s184, %s185
      %p196 = scmp.eq.s32.totalorder %s24, 0
      %p197 = por %p195, %p196
      %p198 = scmp.ne.s32.totalorder %s184, %s185
      %p199 = scmp.eq.s32.totalorder %s25, 1
      %p200 = por %p198, %p199
      %p202 = scmp.ne.s32.totalorder %s185, %s201
      %p203 = scmp.eq.s32.totalorder %s25, 0
      %p204 = por %p202, %p203
      %p205 = scmp.le.s32.totalorder 1, %s19
      %p206 = scmp.lt.s32.totalorder %s19, 3
      %p207 = pnand %p205, %p206
      %p208 = pneg %p207
      // Predicated region
      $region9: #{class_fc_forward.1} parent=5 // pred_check
        _
      $region10: #{class_fc_forward.1} parent=5 // pred_check_branch
        %210 = sbr.rel (%p207) target = $region12
      $region11: #{class_fc_forward.1} parent=5 // pred_region
        %s211 = ssub.s32 %s19, 1
        // Predicated region
        $region13: #{class_fc_forward.1} parent=11 // pred_check
          %p212 = pneg %p66
        $region14: #{class_fc_forward.1} parent=11 // pred_check_branch
          %214 = sbr.rel (%p212) target = $region16
        $region15: #{class_fc_forward.1} parent=11 // pred_region
          _
        $region16: #{class_fc_forward.1} parent=11 // pred_fallthru
          _
        // Predicated region
        $region17: #{class_fc_forward.1} parent=11 // pred_check
          %p215 = pneg %p87
        $region18: #{class_fc_forward.1} parent=11 // pred_check_branch
          %217 = sbr.rel (%p215) target = $region20
        $region19: #{class_fc_forward.1} parent=11 // pred_region
          _
        $region20: #{class_fc_forward.1} parent=11 // pred_fallthru
          _
        // Predicated region
        $region21: #{class_fc_forward.1} parent=11 // pred_check
          %p218 = pneg %p108
        $region22: #{class_fc_forward.1} parent=11 // pred_check_branch
          %220 = sbr.rel (%p218) target = $region24
        $region23: #{class_fc_forward.1} parent=11 // pred_region
          %s222 = ssub.s32 2048, 2048
          %223 = vsyncadd [#allocation6], %s222
          %s224 = sshll.u32 [#allocation5], 4
          %s225 = int_to_ptr.vmem [resolvable:$true] %s224
          %230 = dma.hbm_to_vmem [thread:$0]  %s3, 2048, %s225, [#allocation6], 128, 128, 8
        $region24: #{class_fc_forward.1} parent=11 // pred_fallthru
          _
        // Predicated region
        $region25: #{class_fc_forward.1} parent=11 // pred_check
          %p231 = pneg %p129
        $region26: #{class_fc_forward.1} parent=11 // pred_check_branch
          %233 = sbr.rel (%p231) target = $region28
        $region27: #{class_fc_forward.1} parent=11 // pred_region
          _
        $region28: #{class_fc_forward.1} parent=11 // pred_fallthru
          _
        // Predicated region
        $region29: #{class_fc_forward.1} parent=11 // pred_check
          %p234 = pneg %p150
        $region30: #{class_fc_forward.1} parent=11 // pred_check_branch
          %236 = sbr.rel (%p234) target = $region32
        $region31: #{class_fc_forward.1} parent=11 // pred_region
          _
        $region32: #{class_fc_forward.1} parent=11 // pred_fallthru
          _
        // Predicated region
        $region33: #{class_fc_forward.1} parent=11 // pred_check
          %p237 = pneg %p171
        $region34: #{class_fc_forward.1} parent=11 // pred_check_branch
          %239 = sbr.rel (%p237) target = $region36
        $region35: #{class_fc_forward.1} parent=11 // pred_region
          _
        $region36: #{class_fc_forward.1} parent=11 // pred_fallthru
          _
      $region12: #{class_fc_forward.1} parent=5 // pred_fallthru
        _
      %p240 = scmp.lt.s32.totalorder %s19, 2
      // Predicated region
      $region37: #{class_fc_forward.1} parent=5 // pred_check
        %p241 = pneg %p240
      $region38: #{class_fc_forward.1} parent=5 // pred_check_branch
        %243 = sbr.rel (%p241) target = $region40
      $region39: #{class_fc_forward.1} parent=5 // pred_region
        // Predicated region
        $region41: #{class_fc_forward.1} parent=39 // pred_check
          %p244 = pneg %p39
        $region42: #{class_fc_forward.1} parent=39 // pred_check_branch
          %246 = sbr.rel (%p244) target = $region44
        $region43: #{class_fc_forward.1} parent=39 // pred_region
          %s247 = sand.u32 %s29, 1
          %s248 = scalar_lea.sflag [#allocation4], %s247
          %s249 = sand.u32 %s29, 1
          %s250 = smul.addr %s249, 64
          %s251 = scalar_lea.vmem [#allocation3], %s250
          %s252 = smul.u32 8, %s19
          %s254 = ssub.s32 1024, 1024
          %255 = vsyncadd %s248, %s254
          %s256 = smul.addr %s252, 128
          %s257 = scalar_lea.hbm %s0, %s256
          %s258 = sshll.u32 %s251, 4
          %s259 = int_to_ptr.vmem [resolvable:$true] %s258
          %264 = dma.hbm_to_vmem [thread:$0]  %s257, 1024, %s259, %s248, 128, 128, 8
        $region44: #{class_fc_forward.1} parent=39 // pred_fallthru
          _
      $region40: #{class_fc_forward.1} parent=5 // pred_fallthru
        _
      %p265 = scmp.le.s32.totalorder 1, %s19
      %p266 = scmp.lt.s32.totalorder %s19, 3
      %p267 = pnand %p265, %p266
      %p268 = pneg %p267
      // Predicated region
      $region45: #{class_fc_forward.1} parent=5 // pred_check
        _
      $region46: #{class_fc_forward.1} parent=5 // pred_check_branch
        %270 = sbr.rel (%p267) target = $region48
      $region47: #{class_fc_forward.1} parent=5 // pred_region
        %s271 = ssub.s32 %s19, 1
        %s272 = sand.u32 %s32, 1
        %s273 = scalar_lea.sflag [#allocation4], %s272
        %s274 = sand.u32 %s32, 1
        %s275 = smul.addr %s274, 64
        %s276 = scalar_lea.vmem [#allocation3], %s275
        // Predicated region
        $region49: #{class_fc_forward.1} parent=47 // pred_check
          %p277 = pneg %p45
        $region50: #{class_fc_forward.1} parent=47 // pred_check_branch
          %279 = sbr.rel (%p277) target = $region52
        $region51: #{class_fc_forward.1} parent=47 // pred_region
          %280 = dma.done %s273, 1024
        $region52: #{class_fc_forward.1} parent=47 // pred_fallthru
          _
        // Predicated region
        $region53: #{class_fc_forward.1} parent=47 // pred_check
          %p281 = pneg %p108
        $region54: #{class_fc_forward.1} parent=47 // pred_check_branch
          %283 = sbr.rel (%p281) target = $region56
        $region55: #{class_fc_forward.1} parent=47 // pred_region
          %284 = dma.done [#allocation6], 2048
        $region56: #{class_fc_forward.1} parent=47 // pred_fallthru
          _
        %s285 = sand.u32 %s32, 1
        %s286 = scalar_lea.sflag [#allocation4], %s285
        %s287 = sand.u32 %s32, 1
        %s288 = smul.addr %s287, 64
        %s289 = scalar_lea.vmem [#allocation3], %s288
        %p290 = pneg %p45
        %p291 = pneg %p42
        %p292 = pneg %p66
        %p293 = pneg %p63
        %p294 = pneg %p87
        %p295 = pneg %p84
        %p296 = pneg %p108
        %p297 = pneg %p105
        %p298 = pneg %p129
        %p299 = pneg %p126
        %p300 = pneg %p150
        %p301 = pneg %p147
        %p302 = pneg %p171
        %p303 = pneg %p168
        %p304 = pneg %p197
        %p305 = pneg %p194
        %p306 = scmp.lt.s32.totalorder %s24, 1
        %s307 = scalar_select %p306, %s24, 1
        %s308 = smul.addr %s307, 8
        %s309 = scalar_lea.vmem %s7, %s308
        %s310 = smul.u32 8, %s24
        %p311 = scmp.lt.s32.totalorder %s24, 1
        %s312 = scalar_select %p311, %s24, 1
        %s313 = smul.addr %s312, 8
        %s314 = scalar_lea.vmem %s7, %s313
        %v315 = vld [vmem:[%s276] sm:$0xff]
        %v316 = vld [vmem:[%s276 + $0x8] sm:$0xff]
        %v317 = vld [vmem:[%s276 + $0x10] sm:$0xff]
        %v318 = vld [vmem:[%s276 + $0x18] sm:$0xff]
        %v319 = vld [vmem:[%s276 + $0x20] sm:$0xff]
        %v320 = vld [vmem:[%s276 + $0x28] sm:$0xff]
        %v321 = vld [vmem:[%s276 + $0x30] sm:$0xff]
        %v322 = vld [vmem:[%s276 + $0x38] sm:$0xff]
        %v323 = vld [vmem:[%s1] sm:$0xff]
        %v324 = vld [vmem:[%s1 + $0x8] sm:$0xff]
        %v325 = vld [vmem:[%s1 + $0x10] sm:$0xff]
        %327 = vset.pattern.permute.xlu0 0
        %328 = vperm.xlu0 %327, %v323
        %v329 = vpop.permute.xlu0 %328
        %v331 = vmul.f32 %v315, %v329
        %v332 = vmul.f32 %v316, %v329
        %v333 = vmul.f32 %v317, %v329
        %v334 = vmul.f32 %v318, %v329
        %v335 = vmul.f32 %v319, %v329
        %v336 = vmul.f32 %v320, %v329
        %v337 = vmul.f32 %v321, %v329
        %v338 = vmul.f32 %v322, %v329
        %v339 = vrot.slane %v331, 4
        %v340 = vadd.f32 %v331, %v339
        %v341 = vrot.slane %v340, 2
        %v342 = vadd.f32 %v340, %v341
        %v343 = vrot.slane %v342, 1
        %v344 = vadd.f32 %v342, %v343
        %v345 = vrot.slane %v332, 4
        %v346 = vadd.f32 %v332, %v345
        %v347 = vrot.slane %v346, 2
        %v348 = vadd.f32 %v346, %v347
        %v349 = vrot.slane %v348, 1
        %v350 = vadd.f32 %v348, %v349
        %v351 = vrot.slane %v333, 4
        %v352 = vadd.f32 %v333, %v351
        %v353 = vrot.slane %v352, 2
        %v354 = vadd.f32 %v352, %v353
        %v355 = vrot.slane %v354, 1
        %v356 = vadd.f32 %v354, %v355
        %v357 = vrot.slane %v334, 4
        %v358 = vadd.f32 %v334, %v357
        %v359 = vrot.slane %v358, 2
        %v360 = vadd.f32 %v358, %v359
        %v361 = vrot.slane %v360, 1
        %v362 = vadd.f32 %v360, %v361
        %v363 = vrot.slane %v335, 4
        %v364 = vadd.f32 %v335, %v363
        %v365 = vrot.slane %v364, 2
        %v366 = vadd.f32 %v364, %v365
        %v367 = vrot.slane %v366, 1
        %v368 = vadd.f32 %v366, %v367
        %v369 = vrot.slane %v336, 4
        %v370 = vadd.f32 %v336, %v369
        %v371 = vrot.slane %v370, 2
        %v372 = vadd.f32 %v370, %v371
        %v373 = vrot.slane %v372, 1
        %v374 = vadd.f32 %v372, %v373
        %v375 = vrot.slane %v337, 4
        %v376 = vadd.f32 %v337, %v375
        %v377 = vrot.slane %v376, 2
        %v378 = vadd.f32 %v376, %v377
        %v379 = vrot.slane %v378, 1
        %v380 = vadd.f32 %v378, %v379
        %v381 = vrot.slane %v338, 4
        %v382 = vadd.f32 %v338, %v381
        %v383 = vrot.slane %v382, 2
        %v384 = vadd.f32 %v382, %v383
        %v385 = vrot.slane %v384, 1
        %v386 = vadd.f32 %v384, %v385
        %388 = vset.pattern.permute.xlu0 0
        %389 = vperm.xlu0 %388, %v324
        %v390 = vpop.permute.xlu0 %389
        %v392 = vmul.f32 %v315, %v390
        %v393 = vmul.f32 %v316, %v390
        %v394 = vmul.f32 %v317, %v390
        %v395 = vmul.f32 %v318, %v390
        %v396 = vmul.f32 %v319, %v390
        %v397 = vmul.f32 %v320, %v390
        %v398 = vmul.f32 %v321, %v390
        %v399 = vmul.f32 %v322, %v390
        %v400 = vrot.slane %v392, 4
        %v401 = vadd.f32 %v392, %v400
        %v402 = vrot.slane %v401, 2
        %v403 = vadd.f32 %v401, %v402
        %v404 = vrot.slane %v403, 1
        %v405 = vadd.f32 %v403, %v404
        %v406 = vrot.slane %v393, 4
        %v407 = vadd.f32 %v393, %v406
        %v408 = vrot.slane %v407, 2
        %v409 = vadd.f32 %v407, %v408
        %v410 = vrot.slane %v409, 1
        %v411 = vadd.f32 %v409, %v410
        %v412 = vrot.slane %v394, 4
        %v413 = vadd.f32 %v394, %v412
        %v414 = vrot.slane %v413, 2
        %v415 = vadd.f32 %v413, %v414
        %v416 = vrot.slane %v415, 1
        %v417 = vadd.f32 %v415, %v416
        %v418 = vrot.slane %v395, 4
        %v419 = vadd.f32 %v395, %v418
        %v420 = vrot.slane %v419, 2
        %v421 = vadd.f32 %v419, %v420
        %v422 = vrot.slane %v421, 1
        %v423 = vadd.f32 %v421, %v422
        %v424 = vrot.slane %v396, 4
        %v425 = vadd.f32 %v396, %v424
        %v426 = vrot.slane %v425, 2
        %v427 = vadd.f32 %v425, %v426
        %v428 = vrot.slane %v427, 1
        %v429 = vadd.f32 %v427, %v428
        %v430 = vrot.slane %v397, 4
        %v431 = vadd.f32 %v397, %v430
        %v432 = vrot.slane %v431, 2
        %v433 = vadd.f32 %v431, %v432
        %v434 = vrot.slane %v433, 1
        %v435 = vadd.f32 %v433, %v434
        %v436 = vrot.slane %v398, 4
        %v437 = vadd.f32 %v398, %v436
        %v438 = vrot.slane %v437, 2
        %v439 = vadd.f32 %v437, %v438
        %v440 = vrot.slane %v439, 1
        %v441 = vadd.f32 %v439, %v440
        %v442 = vrot.slane %v399, 4
        %v443 = vadd.f32 %v399, %v442
        %v444 = vrot.slane %v443, 2
        %v445 = vadd.f32 %v443, %v444
        %v446 = vrot.slane %v445, 1
        %v447 = vadd.f32 %v445, %v446
        %449 = vset.pattern.permute.xlu0 0
        %450 = vperm.xlu0 %449, %v325
        %v451 = vpop.permute.xlu0 %450
        %v453 = vmul.f32 %v315, %v451
        %v454 = vmul.f32 %v316, %v451
        %v455 = vmul.f32 %v317, %v451
        %v456 = vmul.f32 %v318, %v451
        %v457 = vmul.f32 %v319, %v451
        %v458 = vmul.f32 %v320, %v451
        %v459 = vmul.f32 %v321, %v451
        %v460 = vmul.f32 %v322, %v451
        %v461 = vrot.slane %v453, 4
        %v462 = vadd.f32 %v453, %v461
        %v463 = vrot.slane %v462, 2
        %v464 = vadd.f32 %v462, %v463
        %v465 = vrot.slane %v464, 1
        %v466 = vadd.f32 %v464, %v465
        %v467 = vrot.slane %v454, 4
        %v468 = vadd.f32 %v454, %v467
        %v469 = vrot.slane %v468, 2
        %v470 = vadd.f32 %v468, %v469
        %v471 = vrot.slane %v470, 1
        %v472 = vadd.f32 %v470, %v471
        %v473 = vrot.slane %v455, 4
        %v474 = vadd.f32 %v455, %v473
        %v475 = vrot.slane %v474, 2
        %v476 = vadd.f32 %v474, %v475
        %v477 = vrot.slane %v476, 1
        %v478 = vadd.f32 %v476, %v477
        %v479 = vrot.slane %v456, 4
        %v480 = vadd.f32 %v456, %v479
        %v481 = vrot.slane %v480, 2
        %v482 = vadd.f32 %v480, %v481
        %v483 = vrot.slane %v482, 1
        %v484 = vadd.f32 %v482, %v483
        %v485 = vrot.slane %v457, 4
        %v486 = vadd.f32 %v457, %v485
        %v487 = vrot.slane %v486, 2
        %v488 = vadd.f32 %v486, %v487
        %v489 = vrot.slane %v488, 1
        %v490 = vadd.f32 %v488, %v489
        %v491 = vrot.slane %v458, 4
        %v492 = vadd.f32 %v458, %v491
        %v493 = vrot.slane %v492, 2
        %v494 = vadd.f32 %v492, %v493
        %v495 = vrot.slane %v494, 1
        %v496 = vadd.f32 %v494, %v495
        %v497 = vrot.slane %v459, 4
        %v498 = vadd.f32 %v459, %v497
        %v499 = vrot.slane %v498, 2
        %v500 = vadd.f32 %v498, %v499
        %v501 = vrot.slane %v500, 1
        %v502 = vadd.f32 %v500, %v501
        %v503 = vrot.slane %v460, 4
        %v504 = vadd.f32 %v460, %v503
        %v505 = vrot.slane %v504, 2
        %v506 = vadd.f32 %v504, %v505
        %v507 = vrot.slane %v506, 1
        %v508 = vadd.f32 %v506, %v507
        %v509 = vlaneseq
        %v510 = vand.u32 %v509, 127
        %vm511 = vcmp.eq.s32.totalorder %v510, 0
        %vm520 = vcmask 1041409
        %v521 = vsel %vm520, %v350, %v344
        %vm522 = vcmask 1042434
        %v523 = vsel %vm522, %v356, %v521
        %vm524 = vcmask 1043459
        %v525 = vsel %vm524, %v362, %v523
        %vm526 = vcmask 1044484
        %v527 = vsel %vm526, %v368, %v525
        %vm528 = vcmask 1045509
        %v529 = vsel %vm528, %v374, %v527
        %vm530 = vcmask 1046534
        %v531 = vsel %vm530, %v380, %v529
        %vm532 = vcmask 1047559
        %v533 = vsel %vm532, %v386, %v531
        %535 = vrot.lane.b32.xlu0 %v533, 1
        %v536 = vpop.permute.xlu0 %535
        %v537 = vsel %vm511, 0.0, %v536
        %vm538 = vcmp.eq.s32.totalorder %v510, 127
        %v547 = vsel %vm520, %v472, %v466
        %v548 = vsel %vm522, %v478, %v547
        %v549 = vsel %vm524, %v484, %v548
        %v550 = vsel %vm526, %v490, %v549
        %v551 = vsel %vm528, %v496, %v550
        %v552 = vsel %vm530, %v502, %v551
        %v553 = vsel %vm532, %v508, %v552
        %555 = vrot.lane.b32.xlu0 %v553, 127
        %v556 = vpop.permute.xlu0 %555
        %v557 = vsel %vm538, 0.0, %v556
        %v559 = vrot.slane %v537, 1
        %v560 = vrot.slane %v537, 2
        %v561 = vrot.slane %v537, 3
        %v562 = vrot.slane %v537, 4
        %v563 = vrot.slane %v537, 5
        %v564 = vrot.slane %v537, 6
        %v565 = vrot.slane %v537, 7
        %v574 = vadd.f32 %v405, %v537
        %v575 = vadd.f32 %v411, %v559
        %v576 = vadd.f32 %v417, %v560
        %v577 = vadd.f32 %v423, %v561
        %v578 = vadd.f32 %v429, %v562
        %v579 = vadd.f32 %v435, %v563
        %v580 = vadd.f32 %v441, %v564
        %v581 = vadd.f32 %v447, %v565
        %v583 = vrot.slane %v557, 1
        %v584 = vrot.slane %v557, 2
        %v585 = vrot.slane %v557, 3
        %v586 = vrot.slane %v557, 4
        %v587 = vrot.slane %v557, 5
        %v588 = vrot.slane %v557, 6
        %v589 = vrot.slane %v557, 7
        %v598 = vadd.f32 %v574, %v557
        %v599 = vadd.f32 %v575, %v583
        %v600 = vadd.f32 %v576, %v584
        %v601 = vadd.f32 %v577, %v585
        %v602 = vadd.f32 %v578, %v586
        %v603 = vadd.f32 %v579, %v587
        %v604 = vadd.f32 %v580, %v588
        %v605 = vadd.f32 %v581, %v589
        %v606 = vld [vmem:[%s2] sm:$0x1]
        %v608 = vlaneseq
        %v609 = vshrl.u32 %v608, 7
        %v610 = vsub.s32 0, %v609
        %v611 = vrot.slane %v606, %v610
        %v613 = vadd.f32 %v598, %v611
        %v614 = vadd.f32 %v599, %v611
        %v615 = vadd.f32 %v600, %v611
        %v616 = vadd.f32 %v601, %v611
        %v617 = vadd.f32 %v602, %v611
        %v618 = vadd.f32 %v603, %v611
        %v619 = vadd.f32 %v604, %v611
        %v620 = vadd.f32 %v605, %v611
        %v621 = vsub.f32 0.0, %v613
        %v622 = vsub.f32 0.0, %v614
        %v623 = vsub.f32 0.0, %v615
        %v624 = vsub.f32 0.0, %v616
        %v625 = vsub.f32 0.0, %v617
        %v626 = vsub.f32 0.0, %v618
        %v627 = vsub.f32 0.0, %v619
        %v628 = vsub.f32 0.0, %v620
        %v629 = vmul.f32 %v621, 1.442695
        %v630 = vpow.pop %v629
        %v631 = vmul.f32 %v622, 1.442695
        %v632 = vpow.pop %v631
        %v633 = vmul.f32 %v623, 1.442695
        %v634 = vpow.pop %v633
        %v635 = vmul.f32 %v624, 1.442695
        %v636 = vpow.pop %v635
        %v637 = vmul.f32 %v625, 1.442695
        %v638 = vpow.pop %v637
        %v639 = vmul.f32 %v626, 1.442695
        %v640 = vpow.pop %v639
        %v641 = vmul.f32 %v627, 1.442695
        %v642 = vpow.pop %v641
        %v643 = vmul.f32 %v628, 1.442695
        %v644 = vpow.pop %v643
        %v645 = vadd.f32 %v630, 1.0
        %v646 = vadd.f32 %v632, 1.0
        %v647 = vadd.f32 %v634, 1.0
        %v648 = vadd.f32 %v636, 1.0
        %v649 = vadd.f32 %v638, 1.0
        %v650 = vadd.f32 %v640, 1.0
        %v651 = vadd.f32 %v642, 1.0
        %v652 = vadd.f32 %v644, 1.0
        %v653 = vrcp.pop %v645
        %v654 = vmul.f32 1.0, %v653
        %v655 = vrcp.pop %v646
        %v656 = vmul.f32 1.0, %v655
        %v657 = vrcp.pop %v647
        %v658 = vmul.f32 1.0, %v657
        %v659 = vrcp.pop %v648
        %v660 = vmul.f32 1.0, %v659
        %v661 = vrcp.pop %v649
        %v662 = vmul.f32 1.0, %v661
        %v663 = vrcp.pop %v650
        %v664 = vmul.f32 1.0, %v663
        %v665 = vrcp.pop %v651
        %v666 = vmul.f32 1.0, %v665
        %v667 = vrcp.pop %v652
        %v668 = vmul.f32 1.0, %v667
        %v669 = vmul.f32 %v613, %v654
        %v670 = vmul.f32 %v614, %v656
        %v671 = vmul.f32 %v615, %v658
        %v672 = vmul.f32 %v616, %v660
        %v673 = vmul.f32 %v617, %v662
        %v674 = vmul.f32 %v618, %v664
        %v675 = vmul.f32 %v619, %v666
        %v676 = vmul.f32 %v620, %v668
        %v677 = vld [vmem:[#allocation5] sm:$0xff]
        %v678 = vld [vmem:[#allocation5 + $0x8] sm:$0xff]
        %v679 = vld [vmem:[#allocation5 + $0x10] sm:$0xff]
        %v680 = vld [vmem:[#allocation5 + $0x18] sm:$0xff]
        %v681 = vld [vmem:[#allocation5 + $0x20] sm:$0xff]
        %v682 = vld [vmem:[#allocation5 + $0x28] sm:$0xff]
        %v683 = vld [vmem:[#allocation5 + $0x30] sm:$0xff]
        %v684 = vld [vmem:[#allocation5 + $0x38] sm:$0xff]
        %v685 = vld [vmem:[#allocation5 + $0x40] sm:$0xff]
        %v686 = vld [vmem:[#allocation5 + $0x48] sm:$0xff]
        %v687 = vld [vmem:[#allocation5 + $0x50] sm:$0xff]
        %v688 = vld [vmem:[#allocation5 + $0x58] sm:$0xff]
        %v689 = vld [vmem:[#allocation5 + $0x60] sm:$0xff]
        %v690 = vld [vmem:[#allocation5 + $0x68] sm:$0xff]
        %v691 = vld [vmem:[#allocation5 + $0x70] sm:$0xff]
        %v692 = vld [vmem:[#allocation5 + $0x78] sm:$0xff]
        %v693 = vld [vmem:[%s4] sm:$0x1]
        %v695 = vlaneseq
        %v696 = vshrl.u32 %v695, 7
        %v697 = vsub.s32 0, %v696
        %v698 = vrot.slane %v693, %v697
        %v708 = vrot.slane %v670, 7
        %v709 = vsel %vm520, %v708, %v669
        %v710 = vrot.slane %v671, 6
        %v711 = vsel %vm522, %v710, %v709
        %v712 = vrot.slane %v672, 5
        %v713 = vsel %vm524, %v712, %v711
        %v714 = vrot.slane %v673, 4
        %v715 = vsel %vm526, %v714, %v713
        %v716 = vrot.slane %v674, 3
        %v717 = vsel %vm528, %v716, %v715
        %v718 = vrot.slane %v675, 2
        %v719 = vsel %vm530, %v718, %v717
        %v720 = vrot.slane %v676, 1
        %v721 = vsel %vm532, %v720, %v719
        %723 = vmatprep.subr.mxu0 0.0
        %v724 = vand.u32 %v677, 4294901760
        %725 = vmatpush1.msra.mxu0 %v724
        %726 = vmatprep.subr.mxu0 0.0
        %v727 = vand.u32 %v678, 4294901760
        %728 = vmatpush1.msra.mxu0 %v727
        %729 = vmatprep.subr.mxu0 0.0
        %v730 = vand.u32 %v679, 4294901760
        %731 = vmatpush1.msra.mxu0 %v730
        %732 = vmatprep.subr.mxu0 0.0
        %v733 = vand.u32 %v680, 4294901760
        %734 = vmatpush1.msra.mxu0 %v733
        %735 = vmatprep.subr.mxu0 0.0
        %v736 = vand.u32 %v681, 4294901760
        %737 = vmatpush1.msra.mxu0 %v736
        %738 = vmatprep.subr.mxu0 0.0
        %v739 = vand.u32 %v682, 4294901760
        %740 = vmatpush1.msra.mxu0 %v739
        %741 = vmatprep.subr.mxu0 0.0
        %v742 = vand.u32 %v683, 4294901760
        %743 = vmatpush1.msra.mxu0 %v742
        %744 = vmatprep.subr.mxu0 0.0
        %v745 = vand.u32 %v684, 4294901760
        %746 = vmatpush1.msra.mxu0 %v745
        %747 = vmatprep.subr.mxu0 0.0
        %v748 = vand.u32 %v685, 4294901760
        %749 = vmatpush1.msra.mxu0 %v748
        %750 = vmatprep.subr.mxu0 0.0
        %v751 = vand.u32 %v686, 4294901760
        %752 = vmatpush1.msra.mxu0 %v751
        %753 = vmatprep.subr.mxu0 0.0
        %v754 = vand.u32 %v687, 4294901760
        %755 = vmatpush1.msra.mxu0 %v754
        %756 = vmatprep.subr.mxu0 0.0
        %v757 = vand.u32 %v688, 4294901760
        %758 = vmatpush1.msra.mxu0 %v757
        %759 = vmatprep.subr.mxu0 0.0
        %v760 = vand.u32 %v689, 4294901760
        %761 = vmatpush1.msra.mxu0 %v760
        %762 = vmatprep.subr.mxu0 0.0
        %v763 = vand.u32 %v690, 4294901760
        %764 = vmatpush1.msra.mxu0 %v763
        %765 = vmatprep.subr.mxu0 0.0
        %v766 = vand.u32 %v691, 4294901760
        %767 = vmatpush1.msra.mxu0 %v766
        %768 = vmatprep.subr.mxu0 0.0
        %v769 = vand.u32 %v692, 4294901760
        %770 = vmatpush1.msra.mxu0 %v769
        %771 = vmatprep.subr.mxu0 0.0
        %772 = vmatpush1.msra.mxu0 0.0
        %773 = vmatprep.subr.mxu0 0.0
        %774 = vmatpush1.msra.mxu0 0.0
        %775 = vmatprep.subr.mxu0 0.0
        %776 = vmatpush1.msra.mxu0 0.0
        %777 = vmatprep.subr.mxu0 0.0
        %778 = vmatpush1.msra.mxu0 0.0
        %779 = vmatprep.subr.mxu0 0.0
        %780 = vmatpush1.msra.mxu0 0.0
        %781 = vmatprep.subr.mxu0 0.0
        %782 = vmatpush1.msra.mxu0 0.0
        %783 = vmatprep.subr.mxu0 0.0
        %784 = vmatpush1.msra.mxu0 0.0
        %785 = vmatprep.subr.mxu0 0.0
        %786 = vmatpush1.msra.mxu0 0.0
        %787 = vmatprep.subr.mxu0 0.0
        %788 = vmatpush1.msra.mxu0 0.0
        %789 = vmatprep.subr.mxu0 0.0
        %790 = vmatpush1.msra.mxu0 0.0
        %791 = vmatprep.subr.mxu0 0.0
        %792 = vmatpush1.msra.mxu0 0.0
        %793 = vmatprep.subr.mxu0 0.0
        %794 = vmatpush1.msra.mxu0 0.0
        %795 = vmatprep.subr.mxu0 0.0
        %796 = vmatpush1.msra.mxu0 0.0
        %797 = vmatprep.subr.mxu0 0.0
        %798 = vmatpush1.msra.mxu0 0.0
        %799 = vmatprep.subr.mxu0 0.0
        %800 = vmatpush1.msra.mxu0 0.0
        %801 = vmatprep.subr.mxu0 0.0
        %802 = vmatpush1.msra.mxu0 0.0
        %803 = vmatprep.mubr.f32.mxu0 0.0
        %v804 = vand.u32 %v721, 4294901760
        %v805 = vsub.f32 %v721, %v804
        %v806 = vand.u32 %v805, 4294901760
        %v807 = vsub.f32 %v805, %v806
        %v808 = vand.u32 %v807, 4294901760
        %809 = vmatmul.mubr.f32.gmra.mrb[0].mxu0 %v808
        %v810 = vpop.f32.mrb[0].mxu0
        %v811 = vadd.f32 %v698, %v810
        %v812 = vpop.f32.mrb[0].mxu0
        %813 = vdwg.mxu0
        %814 = vmatprep.subr.mxu0 0.0
        %v815 = vand.u32 %v677, 4294901760
        %v816 = vsub.f32 %v677, %v815
        %v817 = vand.u32 %v816, 4294901760
        %v818 = vsub.f32 %v816, %v817
        %v819 = vand.u32 %v818, 4294901760
        %820 = vmatpush1.msra.mxu0 %v819
        %821 = vmatprep.subr.mxu0 0.0
        %v822 = vand.u32 %v678, 4294901760
        %v823 = vsub.f32 %v678, %v822
        %v824 = vand.u32 %v823, 4294901760
        %v825 = vsub.f32 %v823, %v824
        %v826 = vand.u32 %v825, 4294901760
        %827 = vmatpush1.msra.mxu0 %v826
        %828 = vmatprep.subr.mxu0 0.0
        %v829 = vand.u32 %v679, 4294901760
        %v830 = vsub.f32 %v679, %v829
        %v831 = vand.u32 %v830, 4294901760
        %v832 = vsub.f32 %v830, %v831
        %v833 = vand.u32 %v832, 4294901760
        %834 = vmatpush1.msra.mxu0 %v833
        %835 = vmatprep.subr.mxu0 0.0
        %v836 = vand.u32 %v680, 4294901760
        %v837 = vsub.f32 %v680, %v836
        %v838 = vand.u32 %v837, 4294901760
        %v839 = vsub.f32 %v837, %v838
        %v840 = vand.u32 %v839, 4294901760
        %841 = vmatpush1.msra.mxu0 %v840
        %842 = vmatprep.subr.mxu0 0.0
        %v843 = vand.u32 %v681, 4294901760
        %v844 = vsub.f32 %v681, %v843
        %v845 = vand.u32 %v844, 4294901760
        %v846 = vsub.f32 %v844, %v845
        %v847 = vand.u32 %v846, 4294901760
        %848 = vmatpush1.msra.mxu0 %v847
        %849 = vmatprep.subr.mxu0 0.0
        %v850 = vand.u32 %v682, 4294901760
        %v851 = vsub.f32 %v682, %v850
        %v852 = vand.u32 %v851, 4294901760
        %v853 = vsub.f32 %v851, %v852
        %v854 = vand.u32 %v853, 4294901760
        %855 = vmatpush1.msra.mxu0 %v854
        %856 = vmatprep.subr.mxu0 0.0
        %v857 = vand.u32 %v683, 4294901760
        %v858 = vsub.f32 %v683, %v857
        %v859 = vand.u32 %v858, 4294901760
        %v860 = vsub.f32 %v858, %v859
        %v861 = vand.u32 %v860, 4294901760
        %862 = vmatpush1.msra.mxu0 %v861
        %863 = vmatprep.subr.mxu0 0.0
        %v864 = vand.u32 %v684, 4294901760
        %v865 = vsub.f32 %v684, %v864
        %v866 = vand.u32 %v865, 4294901760
        %v867 = vsub.f32 %v865, %v866
        %v868 = vand.u32 %v867, 4294901760
        %869 = vmatpush1.msra.mxu0 %v868
        %870 = vmatprep.subr.mxu0 0.0
        %v871 = vand.u32 %v685, 4294901760
        %v872 = vsub.f32 %v685, %v871
        %v873 = vand.u32 %v872, 4294901760
        %v874 = vsub.f32 %v872, %v873
        %v875 = vand.u32 %v874, 4294901760
        %876 = vmatpush1.msra.mxu0 %v875
        %877 = vmatprep.subr.mxu0 0.0
        %v878 = vand.u32 %v686, 4294901760
        %v879 = vsub.f32 %v686, %v878
        %v880 = vand.u32 %v879, 4294901760
        %v881 = vsub.f32 %v879, %v880
        %v882 = vand.u32 %v881, 4294901760
        %883 = vmatpush1.msra.mxu0 %v882
        %884 = vmatprep.subr.mxu0 0.0
        %v885 = vand.u32 %v687, 4294901760
        %v886 = vsub.f32 %v687, %v885
        %v887 = vand.u32 %v886, 4294901760
        %v888 = vsub.f32 %v886, %v887
        %v889 = vand.u32 %v888, 4294901760
        %890 = vmatpush1.msra.mxu0 %v889
        %891 = vmatprep.subr.mxu0 0.0
        %v892 = vand.u32 %v688, 4294901760
        %v893 = vsub.f32 %v688, %v892
        %v894 = vand.u32 %v893, 4294901760
        %v895 = vsub.f32 %v893, %v894
        %v896 = vand.u32 %v895, 4294901760
        %897 = vmatpush1.msra.mxu0 %v896
        %898 = vmatprep.subr.mxu0 0.0
        %v899 = vand.u32 %v689, 4294901760
        %v900 = vsub.f32 %v689, %v899
        %v901 = vand.u32 %v900, 4294901760
        %v902 = vsub.f32 %v900, %v901
        %v903 = vand.u32 %v902, 4294901760
        %904 = vmatpush1.msra.mxu0 %v903
        %905 = vmatprep.subr.mxu0 0.0
        %v906 = vand.u32 %v690, 4294901760
        %v907 = vsub.f32 %v690, %v906
        %v908 = vand.u32 %v907, 4294901760
        %v909 = vsub.f32 %v907, %v908
        %v910 = vand.u32 %v909, 4294901760
        %911 = vmatpush1.msra.mxu0 %v910
        %912 = vmatprep.subr.mxu0 0.0
        %v913 = vand.u32 %v691, 4294901760
        %v914 = vsub.f32 %v691, %v913
        %v915 = vand.u32 %v914, 4294901760
        %v916 = vsub.f32 %v914, %v915
        %v917 = vand.u32 %v916, 4294901760
        %918 = vmatpush1.msra.mxu0 %v917
        %919 = vmatprep.subr.mxu0 0.0
        %v920 = vand.u32 %v692, 4294901760
        %v921 = vsub.f32 %v692, %v920
        %v922 = vand.u32 %v921, 4294901760
        %v923 = vsub.f32 %v921, %v922
        %v924 = vand.u32 %v923, 4294901760
        %925 = vmatpush1.msra.mxu0 %v924
        %926 = vmatprep.subr.mxu0 0.0
        %927 = vmatpush1.msra.mxu0 0.0
        %928 = vmatprep.subr.mxu0 0.0
        %929 = vmatpush1.msra.mxu0 0.0
        %930 = vmatprep.subr.mxu0 0.0
        %931 = vmatpush1.msra.mxu0 0.0
        %932 = vmatprep.subr.mxu0 0.0
        %933 = vmatpush1.msra.mxu0 0.0
        %934 = vmatprep.subr.mxu0 0.0
        %935 = vmatpush1.msra.mxu0 0.0
        %936 = vmatprep.subr.mxu0 0.0
        %937 = vmatpush1.msra.mxu0 0.0
        %938 = vmatprep.subr.mxu0 0.0
        %939 = vmatpush1.msra.mxu0 0.0
        %940 = vmatprep.subr.mxu0 0.0
        %941 = vmatpush1.msra.mxu0 0.0
        %942 = vmatprep.subr.mxu0 0.0
        %943 = vmatpush1.msra.mxu0 0.0
        %944 = vmatprep.subr.mxu0 0.0
        %945 = vmatpush1.msra.mxu0 0.0
        %946 = vmatprep.subr.mxu0 0.0
        %947 = vmatpush1.msra.mxu0 0.0
        %948 = vmatprep.subr.mxu0 0.0
        %949 = vmatpush1.msra.mxu0 0.0
        %950 = vmatprep.subr.mxu0 0.0
        %951 = vmatpush1.msra.mxu0 0.0
        %952 = vmatprep.subr.mxu0 0.0
        %953 = vmatpush1.msra.mxu0 0.0
        %954 = vmatprep.subr.mxu0 0.0
        %955 = vmatpush1.msra.mxu0 0.0
        %956 = vmatprep.subr.mxu0 0.0
        %957 = vmatpush1.msra.mxu0 0.0
        %958 = vmatprep.mubr.f32.mxu0 0.0
        %v959 = vand.u32 %v721, 4294901760
        %960 = vmatmul.mubr.f32.gmra.mrb[0].mxu0 %v959
        %v961 = vpop.f32.mrb[0].mxu0
        %v962 = vadd.f32 %v811, %v961
        %v963 = vpop.f32.mrb[0].mxu0
        %964 = vdwg.mxu0
        %965 = vmatprep.subr.mxu0 0.0
        %v966 = vand.u32 %v677, 4294901760
        %v967 = vsub.f32 %v677, %v966
        %968 = vmatpush1.msra.mxu0 %v967
        %969 = vmatprep.subr.mxu0 0.0
        %v970 = vand.u32 %v678, 4294901760
        %v971 = vsub.f32 %v678, %v970
        %972 = vmatpush1.msra.mxu0 %v971
        %973 = vmatprep.subr.mxu0 0.0
        %v974 = vand.u32 %v679, 4294901760
        %v975 = vsub.f32 %v679, %v974
        %976 = vmatpush1.msra.mxu0 %v975
        %977 = vmatprep.subr.mxu0 0.0
        %v978 = vand.u32 %v680, 4294901760
        %v979 = vsub.f32 %v680, %v978
        %980 = vmatpush1.msra.mxu0 %v979
        %981 = vmatprep.subr.mxu0 0.0
        %v982 = vand.u32 %v681, 4294901760
        %v983 = vsub.f32 %v681, %v982
        %984 = vmatpush1.msra.mxu0 %v983
        %985 = vmatprep.subr.mxu0 0.0
        %v986 = vand.u32 %v682, 4294901760
        %v987 = vsub.f32 %v682, %v986
        %988 = vmatpush1.msra.mxu0 %v987
        %989 = vmatprep.subr.mxu0 0.0
        %v990 = vand.u32 %v683, 4294901760
        %v991 = vsub.f32 %v683, %v990
        %992 = vmatpush1.msra.mxu0 %v991
        %993 = vmatprep.subr.mxu0 0.0
        %v994 = vand.u32 %v684, 4294901760
        %v995 = vsub.f32 %v684, %v994
        %996 = vmatpush1.msra.mxu0 %v995
        %997 = vmatprep.subr.mxu0 0.0
        %v998 = vand.u32 %v685, 4294901760
        %v999 = vsub.f32 %v685, %v998
        %1000 = vmatpush1.msra.mxu0 %v999
        %1001 = vmatprep.subr.mxu0 0.0
        %v1002 = vand.u32 %v686, 4294901760
        %v1003 = vsub.f32 %v686, %v1002
        %1004 = vmatpush1.msra.mxu0 %v1003
        %1005 = vmatprep.subr.mxu0 0.0
        %v1006 = vand.u32 %v687, 4294901760
        %v1007 = vsub.f32 %v687, %v1006
        %1008 = vmatpush1.msra.mxu0 %v1007
        %1009 = vmatprep.subr.mxu0 0.0
        %v1010 = vand.u32 %v688, 4294901760
        %v1011 = vsub.f32 %v688, %v1010
        %1012 = vmatpush1.msra.mxu0 %v1011
        %1013 = vmatprep.subr.mxu0 0.0
        %v1014 = vand.u32 %v689, 4294901760
        %v1015 = vsub.f32 %v689, %v1014
        %1016 = vmatpush1.msra.mxu0 %v1015
        %1017 = vmatprep.subr.mxu0 0.0
        %v1018 = vand.u32 %v690, 4294901760
        %v1019 = vsub.f32 %v690, %v1018
        %1020 = vmatpush1.msra.mxu0 %v1019
        %1021 = vmatprep.subr.mxu0 0.0
        %v1022 = vand.u32 %v691, 4294901760
        %v1023 = vsub.f32 %v691, %v1022
        %1024 = vmatpush1.msra.mxu0 %v1023
        %1025 = vmatprep.subr.mxu0 0.0
        %v1026 = vand.u32 %v692, 4294901760
        %v1027 = vsub.f32 %v692, %v1026
        %1028 = vmatpush1.msra.mxu0 %v1027
        %1029 = vmatprep.subr.mxu0 0.0
        %1030 = vmatpush1.msra.mxu0 0.0
        %1031 = vmatprep.subr.mxu0 0.0
        %1032 = vmatpush1.msra.mxu0 0.0
        %1033 = vmatprep.subr.mxu0 0.0
        %1034 = vmatpush1.msra.mxu0 0.0
        %1035 = vmatprep.subr.mxu0 0.0
        %1036 = vmatpush1.msra.mxu0 0.0
        %1037 = vmatprep.subr.mxu0 0.0
        %1038 = vmatpush1.msra.mxu0 0.0
        %1039 = vmatprep.subr.mxu0 0.0
        %1040 = vmatpush1.msra.mxu0 0.0
        %1041 = vmatprep.subr.mxu0 0.0
        %1042 = vmatpush1.msra.mxu0 0.0
        %1043 = vmatprep.subr.mxu0 0.0
        %1044 = vmatpush1.msra.mxu0 0.0
        %1045 = vmatprep.subr.mxu0 0.0
        %1046 = vmatpush1.msra.mxu0 0.0
        %1047 = vmatprep.subr.mxu0 0.0
        %1048 = vmatpush1.msra.mxu0 0.0
        %1049 = vmatprep.subr.mxu0 0.0
        %1050 = vmatpush1.msra.mxu0 0.0
        %1051 = vmatprep.subr.mxu0 0.0
        %1052 = vmatpush1.msra.mxu0 0.0
        %1053 = vmatprep.subr.mxu0 0.0
        %1054 = vmatpush1.msra.mxu0 0.0
        %1055 = vmatprep.subr.mxu0 0.0
        %1056 = vmatpush1.msra.mxu0 0.0
        %1057 = vmatprep.subr.mxu0 0.0
        %1058 = vmatpush1.msra.mxu0 0.0
        %1059 = vmatprep.subr.mxu0 0.0
        %1060 = vmatpush1.msra.mxu0 0.0
        %1061 = vmatprep.mubr.f32.mxu0 0.0
        %v1062 = vand.u32 %v721, 4294901760
        %v1063 = vsub.f32 %v721, %v1062
        %1064 = vmatmul.mubr.f32.gmra.mrb[0].mxu0 %v1063
        %v1065 = vpop.f32.mrb[0].mxu0
        %v1066 = vadd.f32 %v962, %v1065
        %v1067 = vpop.f32.mrb[0].mxu0
        %1068 = vdwg.mxu0
        %1069 = vmatprep.subr.mxu0 0.0
        %v1070 = vand.u32 %v677, 4294901760
        %1071 = vmatpush1.msra.mxu0 %v1070
        %1072 = vmatprep.subr.mxu0 0.0
        %v1073 = vand.u32 %v678, 4294901760
        %1074 = vmatpush1.msra.mxu0 %v1073
        %1075 = vmatprep.subr.mxu0 0.0
        %v1076 = vand.u32 %v679, 4294901760
        %1077 = vmatpush1.msra.mxu0 %v1076
        %1078 = vmatprep.subr.mxu0 0.0
        %v1079 = vand.u32 %v680, 4294901760
        %1080 = vmatpush1.msra.mxu0 %v1079
        %1081 = vmatprep.subr.mxu0 0.0
        %v1082 = vand.u32 %v681, 4294901760
        %1083 = vmatpush1.msra.mxu0 %v1082
        %1084 = vmatprep.subr.mxu0 0.0
        %v1085 = vand.u32 %v682, 4294901760
        %1086 = vmatpush1.msra.mxu0 %v1085
        %1087 = vmatprep.subr.mxu0 0.0
        %v1088 = vand.u32 %v683, 4294901760
        %1089 = vmatpush1.msra.mxu0 %v1088
        %1090 = vmatprep.subr.mxu0 0.0
        %v1091 = vand.u32 %v684, 4294901760
        %1092 = vmatpush1.msra.mxu0 %v1091
        %1093 = vmatprep.subr.mxu0 0.0
        %v1094 = vand.u32 %v685, 4294901760
        %1095 = vmatpush1.msra.mxu0 %v1094
        %1096 = vmatprep.subr.mxu0 0.0
        %v1097 = vand.u32 %v686, 4294901760
        %1098 = vmatpush1.msra.mxu0 %v1097
        %1099 = vmatprep.subr.mxu0 0.0
        %v1100 = vand.u32 %v687, 4294901760
        %1101 = vmatpush1.msra.mxu0 %v1100
        %1102 = vmatprep.subr.mxu0 0.0
        %v1103 = vand.u32 %v688, 4294901760
        %1104 = vmatpush1.msra.mxu0 %v1103
        %1105 = vmatprep.subr.mxu0 0.0
        %v1106 = vand.u32 %v689, 4294901760
        %1107 = vmatpush1.msra.mxu0 %v1106
        %1108 = vmatprep.subr.mxu0 0.0
        %v1109 = vand.u32 %v690, 4294901760
        %1110 = vmatpush1.msra.mxu0 %v1109
        %1111 = vmatprep.subr.mxu0 0.0
        %v1112 = vand.u32 %v691, 4294901760
        %1113 = vmatpush1.msra.mxu0 %v1112
        %1114 = vmatprep.subr.mxu0 0.0
        %v1115 = vand.u32 %v692, 4294901760
        %1116 = vmatpush1.msra.mxu0 %v1115
        %1117 = vmatprep.subr.mxu0 0.0
        %1118 = vmatpush1.msra.mxu0 0.0
        %1119 = vmatprep.subr.mxu0 0.0
        %1120 = vmatpush1.msra.mxu0 0.0
        %1121 = vmatprep.subr.mxu0 0.0
        %1122 = vmatpush1.msra.mxu0 0.0
        %1123 = vmatprep.subr.mxu0 0.0
        %1124 = vmatpush1.msra.mxu0 0.0
        %1125 = vmatprep.subr.mxu0 0.0
        %1126 = vmatpush1.msra.mxu0 0.0
        %1127 = vmatprep.subr.mxu0 0.0
        %1128 = vmatpush1.msra.mxu0 0.0
        %1129 = vmatprep.subr.mxu0 0.0
        %1130 = vmatpush1.msra.mxu0 0.0
        %1131 = vmatprep.subr.mxu0 0.0
        %1132 = vmatpush1.msra.mxu0 0.0
        %1133 = vmatprep.subr.mxu0 0.0
        %1134 = vmatpush1.msra.mxu0 0.0
        %1135 = vmatprep.subr.mxu0 0.0
        %1136 = vmatpush1.msra.mxu0 0.0
        %1137 = vmatprep.subr.mxu0 0.0
        %1138 = vmatpush1.msra.mxu0 0.0
        %1139 = vmatprep.subr.mxu0 0.0
        %1140 = vmatpush1.msra.mxu0 0.0
        %1141 = vmatprep.subr.mxu0 0.0
        %1142 = vmatpush1.msra.mxu0 0.0
        %1143 = vmatprep.subr.mxu0 0.0
        %1144 = vmatpush1.msra.mxu0 0.0
        %1145 = vmatprep.subr.mxu0 0.0
        %1146 = vmatpush1.msra.mxu0 0.0
        %1147 = vmatprep.subr.mxu0 0.0
        %1148 = vmatpush1.msra.mxu0 0.0
        %1149 = vmatprep.mubr.f32.mxu0 0.0
        %v1150 = vand.u32 %v721, 4294901760
        %v1151 = vsub.f32 %v721, %v1150
        %v1152 = vand.u32 %v1151, 4294901760
        %1153 = vmatmul.mubr.f32.gmra.mrb[0].mxu0 %v1152
        %v1154 = vpop.f32.mrb[0].mxu0
        %v1155 = vadd.f32 %v1066, %v1154
        %v1156 = vpop.f32.mrb[0].mxu0
        %1157 = vdwg.mxu0
        %1158 = vmatprep.subr.mxu0 0.0
        %v1159 = vand.u32 %v677, 4294901760
        %v1160 = vsub.f32 %v677, %v1159
        %v1161 = vand.u32 %v1160, 4294901760
        %1162 = vmatpush1.msra.mxu0 %v1161
        %1163 = vmatprep.subr.mxu0 0.0
        %v1164 = vand.u32 %v678, 4294901760
        %v1165 = vsub.f32 %v678, %v1164
        %v1166 = vand.u32 %v1165, 4294901760
        %1167 = vmatpush1.msra.mxu0 %v1166
        %1168 = vmatprep.subr.mxu0 0.0
        %v1169 = vand.u32 %v679, 4294901760
        %v1170 = vsub.f32 %v679, %v1169
        %v1171 = vand.u32 %v1170, 4294901760
        %1172 = vmatpush1.msra.mxu0 %v1171
        %1173 = vmatprep.subr.mxu0 0.0
        %v1174 = vand.u32 %v680, 4294901760
        %v1175 = vsub.f32 %v680, %v1174
        %v1176 = vand.u32 %v1175, 4294901760
        %1177 = vmatpush1.msra.mxu0 %v1176
        %1178 = vmatprep.subr.mxu0 0.0
        %v1179 = vand.u32 %v681, 4294901760
        %v1180 = vsub.f32 %v681, %v1179
        %v1181 = vand.u32 %v1180, 4294901760
        %1182 = vmatpush1.msra.mxu0 %v1181
        %1183 = vmatprep.subr.mxu0 0.0
        %v1184 = vand.u32 %v682, 4294901760
        %v1185 = vsub.f32 %v682, %v1184
        %v1186 = vand.u32 %v1185, 4294901760
        %1187 = vmatpush1.msra.mxu0 %v1186
        %1188 = vmatprep.subr.mxu0 0.0
        %v1189 = vand.u32 %v683, 4294901760
        %v1190 = vsub.f32 %v683, %v1189
        %v1191 = vand.u32 %v1190, 4294901760
        %1192 = vmatpush1.msra.mxu0 %v1191
        %1193 = vmatprep.subr.mxu0 0.0
        %v1194 = vand.u32 %v684, 4294901760
        %v1195 = vsub.f32 %v684, %v1194
        %v1196 = vand.u32 %v1195, 4294901760
        %1197 = vmatpush1.msra.mxu0 %v1196
        %1198 = vmatprep.subr.mxu0 0.0
        %v1199 = vand.u32 %v685, 4294901760
        %v1200 = vsub.f32 %v685, %v1199
        %v1201 = vand.u32 %v1200, 4294901760
        %1202 = vmatpush1.msra.mxu0 %v1201
        %1203 = vmatprep.subr.mxu0 0.0
        %v1204 = vand.u32 %v686, 4294901760
        %v1205 = vsub.f32 %v686, %v1204
        %v1206 = vand.u32 %v1205, 4294901760
        %1207 = vmatpush1.msra.mxu0 %v1206
        %1208 = vmatprep.subr.mxu0 0.0
        %v1209 = vand.u32 %v687, 4294901760
        %v1210 = vsub.f32 %v687, %v1209
        %v1211 = vand.u32 %v1210, 4294901760
        %1212 = vmatpush1.msra.mxu0 %v1211
        %1213 = vmatprep.subr.mxu0 0.0
        %v1214 = vand.u32 %v688, 4294901760
        %v1215 = vsub.f32 %v688, %v1214
        %v1216 = vand.u32 %v1215, 4294901760
        %1217 = vmatpush1.msra.mxu0 %v1216
        %1218 = vmatprep.subr.mxu0 0.0
        %v1219 = vand.u32 %v689, 4294901760
        %v1220 = vsub.f32 %v689, %v1219
        %v1221 = vand.u32 %v1220, 4294901760
        %1222 = vmatpush1.msra.mxu0 %v1221
        %1223 = vmatprep.subr.mxu0 0.0
        %v1224 = vand.u32 %v690, 4294901760
        %v1225 = vsub.f32 %v690, %v1224
        %v1226 = vand.u32 %v1225, 4294901760
        %1227 = vmatpush1.msra.mxu0 %v1226
        %1228 = vmatprep.subr.mxu0 0.0
        %v1229 = vand.u32 %v691, 4294901760
        %v1230 = vsub.f32 %v691, %v1229
        %v1231 = vand.u32 %v1230, 4294901760
        %1232 = vmatpush1.msra.mxu0 %v1231
        %1233 = vmatprep.subr.mxu0 0.0
        %v1234 = vand.u32 %v692, 4294901760
        %v1235 = vsub.f32 %v692, %v1234
        %v1236 = vand.u32 %v1235, 4294901760
        %1237 = vmatpush1.msra.mxu0 %v1236
        %1238 = vmatprep.subr.mxu0 0.0
        %1239 = vmatpush1.msra.mxu0 0.0
        %1240 = vmatprep.subr.mxu0 0.0
        %1241 = vmatpush1.msra.mxu0 0.0
        %1242 = vmatprep.subr.mxu0 0.0
        %1243 = vmatpush1.msra.mxu0 0.0
        %1244 = vmatprep.subr.mxu0 0.0
        %1245 = vmatpush1.msra.mxu0 0.0
        %1246 = vmatprep.subr.mxu0 0.0
        %1247 = vmatpush1.msra.mxu0 0.0
        %1248 = vmatprep.subr.mxu0 0.0
        %1249 = vmatpush1.msra.mxu0 0.0
        %1250 = vmatprep.subr.mxu0 0.0
        %1251 = vmatpush1.msra.mxu0 0.0
        %1252 = vmatprep.subr.mxu0 0.0
        %1253 = vmatpush1.msra.mxu0 0.0
        %1254 = vmatprep.subr.mxu0 0.0
        %1255 = vmatpush1.msra.mxu0 0.0
        %1256 = vmatprep.subr.mxu0 0.0
        %1257 = vmatpush1.msra.mxu0 0.0
        %1258 = vmatprep.subr.mxu0 0.0
        %1259 = vmatpush1.msra.mxu0 0.0
        %1260 = vmatprep.subr.mxu0 0.0
        %1261 = vmatpush1.msra.mxu0 0.0
        %1262 = vmatprep.subr.mxu0 0.0
        %1263 = vmatpush1.msra.mxu0 0.0
        %1264 = vmatprep.subr.mxu0 0.0
        %1265 = vmatpush1.msra.mxu0 0.0
        %1266 = vmatprep.subr.mxu0 0.0
        %1267 = vmatpush1.msra.mxu0 0.0
        %1268 = vmatprep.subr.mxu0 0.0
        %1269 = vmatpush1.msra.mxu0 0.0
        %1270 = vmatprep.mubr.f32.mxu0 0.0
        %v1271 = vand.u32 %v721, 4294901760
        %1272 = vmatmul.mubr.f32.gmra.mrb[0].mxu0 %v1271
        %v1273 = vpop.f32.mrb[0].mxu0
        %v1274 = vadd.f32 %v1155, %v1273
        %v1275 = vpop.f32.mrb[0].mxu0
        %1276 = vdwg.mxu0
        %1277 = vmatprep.subr.mxu0 0.0
        %v1278 = vand.u32 %v677, 4294901760
        %1279 = vmatpush1.msra.mxu0 %v1278
        %1280 = vmatprep.subr.mxu0 0.0
        %v1281 = vand.u32 %v678, 4294901760
        %1282 = vmatpush1.msra.mxu0 %v1281
        %1283 = vmatprep.subr.mxu0 0.0
        %v1284 = vand.u32 %v679, 4294901760
        %1285 = vmatpush1.msra.mxu0 %v1284
        %1286 = vmatprep.subr.mxu0 0.0
        %v1287 = vand.u32 %v680, 4294901760
        %1288 = vmatpush1.msra.mxu0 %v1287
        %1289 = vmatprep.subr.mxu0 0.0
        %v1290 = vand.u32 %v681, 4294901760
        %1291 = vmatpush1.msra.mxu0 %v1290
        %1292 = vmatprep.subr.mxu0 0.0
        %v1293 = vand.u32 %v682, 4294901760
        %1294 = vmatpush1.msra.mxu0 %v1293
        %1295 = vmatprep.subr.mxu0 0.0
        %v1296 = vand.u32 %v683, 4294901760
        %1297 = vmatpush1.msra.mxu0 %v1296
        %1298 = vmatprep.subr.mxu0 0.0
        %v1299 = vand.u32 %v684, 4294901760
        %1300 = vmatpush1.msra.mxu0 %v1299
        %1301 = vmatprep.subr.mxu0 0.0
        %v1302 = vand.u32 %v685, 4294901760
        %1303 = vmatpush1.msra.mxu0 %v1302
        %1304 = vmatprep.subr.mxu0 0.0
        %v1305 = vand.u32 %v686, 4294901760
        %1306 = vmatpush1.msra.mxu0 %v1305
        %1307 = vmatprep.subr.mxu0 0.0
        %v1308 = vand.u32 %v687, 4294901760
        %1309 = vmatpush1.msra.mxu0 %v1308
        %1310 = vmatprep.subr.mxu0 0.0
        %v1311 = vand.u32 %v688, 4294901760
        %1312 = vmatpush1.msra.mxu0 %v1311
        %1313 = vmatprep.subr.mxu0 0.0
        %v1314 = vand.u32 %v689, 4294901760
        %1315 = vmatpush1.msra.mxu0 %v1314
        %1316 = vmatprep.subr.mxu0 0.0
        %v1317 = vand.u32 %v690, 4294901760
        %1318 = vmatpush1.msra.mxu0 %v1317
        %1319 = vmatprep.subr.mxu0 0.0
        %v1320 = vand.u32 %v691, 4294901760
        %1321 = vmatpush1.msra.mxu0 %v1320
        %1322 = vmatprep.subr.mxu0 0.0
        %v1323 = vand.u32 %v692, 4294901760
        %1324 = vmatpush1.msra.mxu0 %v1323
        %1325 = vmatprep.subr.mxu0 0.0
        %1326 = vmatpush1.msra.mxu0 0.0
        %1327 = vmatprep.subr.mxu0 0.0
        %1328 = vmatpush1.msra.mxu0 0.0
        %1329 = vmatprep.subr.mxu0 0.0
        %1330 = vmatpush1.msra.mxu0 0.0
        %1331 = vmatprep.subr.mxu0 0.0
        %1332 = vmatpush1.msra.mxu0 0.0
        %1333 = vmatprep.subr.mxu0 0.0
        %1334 = vmatpush1.msra.mxu0 0.0
        %1335 = vmatprep.subr.mxu0 0.0
        %1336 = vmatpush1.msra.mxu0 0.0
        %1337 = vmatprep.subr.mxu0 0.0
        %1338 = vmatpush1.msra.mxu0 0.0
        %1339 = vmatprep.subr.mxu0 0.0
        %1340 = vmatpush1.msra.mxu0 0.0
        %1341 = vmatprep.subr.mxu0 0.0
        %1342 = vmatpush1.msra.mxu0 0.0
        %1343 = vmatprep.subr.mxu0 0.0
        %1344 = vmatpush1.msra.mxu0 0.0
        %1345 = vmatprep.subr.mxu0 0.0
        %1346 = vmatpush1.msra.mxu0 0.0
        %1347 = vmatprep.subr.mxu0 0.0
        %1348 = vmatpush1.msra.mxu0 0.0
        %1349 = vmatprep.subr.mxu0 0.0
        %1350 = vmatpush1.msra.mxu0 0.0
        %1351 = vmatprep.subr.mxu0 0.0
        %1352 = vmatpush1.msra.mxu0 0.0
        %1353 = vmatprep.subr.mxu0 0.0
        %1354 = vmatpush1.msra.mxu0 0.0
        %1355 = vmatprep.subr.mxu0 0.0
        %1356 = vmatpush1.msra.mxu0 0.0
        %1357 = vmatprep.mubr.f32.mxu0 0.0
        %v1358 = vand.u32 %v721, 4294901760
        %1359 = vmatmul.mubr.f32.gmra.mrb[0].mxu0 %v1358
        %v1360 = vpop.f32.mrb[0].mxu0
        %v1361 = vadd.f32 %v1274, %v1360
        %v1362 = vpop.f32.mrb[0].mxu0
        %1363 = vdwg.mxu0
        %v1364 = vsub.f32 0.0, %v1361
        %v1365 = vmul.f32 %v1364, 1.442695
        %v1366 = vpow.pop %v1365
        %v1367 = vadd.f32 %v1366, 1.0
        %v1368 = vrcp.pop %v1367
        %v1369 = vmul.f32 1.0, %v1368
        %v1370 = vmul.f32 %v1361, %v1369
        %v1371 = vld [vmem:[%s5] sm:$0x1]
        %v1373 = vlaneseq
        %v1374 = vshrl.u32 %v1373, 7
        %v1375 = vsub.s32 0, %v1374
        %v1376 = vrot.slane %v1371, %v1375
        %v1378 = vmul.f32 %v1370, %v1376
        %1379 = vadd.xlane.f32.xlu0 %v1378
        %v1380 = vpop.xlane.xlu0 %1379
        %v1381 = vld [vmem:[#allocation2] sm:$0x1]
        %v1383 = vlaneseq
        %v1384 = vshrl.u32 %v1383, 7
        %v1385 = vsub.s32 0, %v1384
        %v1386 = vrot.slane %v1381, %v1385
        %v1388 = vadd.f32 %v1380, %v1386
        %v1389 = vsub.f32 0.0, %v1388
        %v1390 = vmul.f32 %v1389, 1.442695
        %v1391 = vpow.pop %v1390
        %v1392 = vadd.f32 %v1391, 1.0
        %v1393 = vrcp.pop %v1392
        %v1394 = vmul.f32 1.0, %v1393
        %vm1395 = vcmask 7168
        %1396 = vst.msk [vmem:[%s314] sm:$0xff] %vm1395, %v1394
        %p1397 = scmp.lt.s32.totalorder %s24, 1
        %s1398 = scalar_select %p1397, %s24, 1
        %s1399 = smul.addr %s1398, 8
        %s1400 = scalar_lea.vmem %s7, %s1399
        // Predicated region
        $region57: #{class_fc_forward.1} parent=47 // pred_check
          %p1401 = pneg %p194
        $region58: #{class_fc_forward.1} parent=47 // pred_check_branch
          %1403 = sbr.rel (%p1401) target = $region60
        $region59: #{class_fc_forward.1} parent=47 // pred_region
          _
        $region60: #{class_fc_forward.1} parent=47 // pred_fallthru
          _
      $region48: #{class_fc_forward.1} parent=5 // pred_fallthru
        _
      %p1404 = scmp.le.s32.totalorder 2, %s19
      // Predicated region
      $region61: #{class_fc_forward.1} parent=5 // pred_check
        %p1405 = pneg %p1404
      $region62: #{class_fc_forward.1} parent=5 // pred_check_branch
        %1407 = sbr.rel (%p1405) target = $region64
      $region63: #{class_fc_forward.1} parent=5 // pred_region
        %s1408 = ssub.s32 %s19, 2
        // Predicated region
        $region65: #{class_fc_forward.1} parent=63 // pred_check
          %p1409 = pneg %p200
        $region66: #{class_fc_forward.1} parent=63 // pred_check_branch
          %1411 = sbr.rel (%p1409) target = $region68
        $region67: #{class_fc_forward.1} parent=63 // pred_region
          %p1412 = scmp.lt.s32.totalorder %s25, 1
          %s1413 = scalar_select %p1412, %s25, 1
          %s1414 = smul.addr %s1413, 8
          %s1415 = scalar_lea.vmem %s7, %s1414
        $region68: #{class_fc_forward.1} parent=63 // pred_fallthru
          _
      $region64: #{class_fc_forward.1} parent=5 // pred_fallthru
        _
    $region6: #{class_fc_forward.1} parent=1 // loop_footer
      %s23 = sadd.s32 1, %s19
    $region7: #{class_fc_forward.1} parent=1 // loop_footer_branch
      %18 = sbr.rel target = $region3
    $region8: #{class_fc_forward.1} parent=1 // loop_exit
      _
    %1416 = vsyncpa [#allocation4], 1
    %s1417 = scalar_lea.sflag [#allocation4], 1
    %1418 = vsyncpa %s1417, 1
    %1419 = vsyncpa [#allocation6], 1

</llo_original>
